<compile_context>
chip_gen: v7x
topology: tpu7x:2x2x1
jax: 0.10.0
libtpu: 0.0.40
codegen_flags: <defaults>
</compile_context>

<pallas_src>
import functools

import jax
import jax.numpy as jnp
from jax.experimental import pallas as pl
from jax.experimental.pallas import tpu as pltpu

LANE = 128          # TPU lane width; conv activations are padded to this many channels.
CONV3_CHANNELS = 64 # real channel count of the last conv layer.


def _round_up(x, m):
    return ((x + m - 1) // m) * m


# -----------------------------------------------------------------------------
# Pallas kernels
# -----------------------------------------------------------------------------
def _matmul_bias_kernel(x_ref, w_ref, b_ref, o_ref, *, apply_relu):
    """o = [relu](x @ w + b); bf16 operands, f32 MXU accumulation, f32 epilogue."""
    acc = jnp.dot(x_ref[...], w_ref[...], preferred_element_type=jnp.float32)
    acc = acc + b_ref[...]
    if apply_relu:
        acc = jnp.maximum(acc, 0.0)
    o_ref[...] = acc.astype(o_ref.dtype)


def _fc_head_kernel(x_ref, w1_ref, b1_ref, w2_ref, b2_ref, o_ref):
    """Fused Linear -> ReLU -> Linear; hidden activation stays in vregs/VMEM."""
    h = jnp.dot(x_ref[...], w1_ref[...], preferred_element_type=jnp.float32)
    h = jnp.maximum(h + b1_ref[...], 0.0).astype(w2_ref.dtype)
    out = jnp.dot(h, w2_ref[...], preferred_element_type=jnp.float32)
    o_ref[...] = (out + b2_ref[...]).astype(o_ref.dtype)


# -----------------------------------------------------------------------------
# Pallas wrappers (M-tiled grid, weights resident, bias invariant per step)
# -----------------------------------------------------------------------------
def pallas_dense(x, w_p, b_p, *, apply_relu, out_dtype=jnp.bfloat16, block_m=256):
    """y = [relu](x @ w_p + b_p). x:(M,K) bf16, w_p:(K,Np) bf16 pre-padded, b_p:(1,Np) f32."""
    M, K = x.shape
    Kw, Np = w_p.shape
    assert K == Kw, (K, Kw)
    tm = min(block_m, _round_up(M, 8))
    Mp = _round_up(M, tm)
    x = jnp.pad(x.astype(jnp.bfloat16), ((0, Mp - M), (0, 0)))

    out = pl.pallas_call(
        functools.partial(_matmul_bias_kernel, apply_relu=apply_relu),
        out_shape=jax.ShapeDtypeStruct((Mp, Np), out_dtype),
        grid=(Mp // tm,),
        in_specs=[
            pl.BlockSpec((tm, K), lambda i: (i, 0)),    # activation tile (pipelined)
            pl.BlockSpec((K, Np), lambda i: (0, 0)),    # weight: same block every step
            pl.BlockSpec((1, Np), lambda i: (0, 0)),    # bias: grid-invariant
        ],
        out_specs=pl.BlockSpec((tm, Np), lambda i: (i, 0)),
        compiler_params=pltpu.CompilerParams(
            dimension_semantics=("parallel",)),         # megacore-shardable
    )(x, w_p, b_p)
    return out[:M]


def pallas_fc_head(x, w1_p, b1_p, w2_p, b2_p, *, block_m=256):
    """Fused (x @ w1 + b1).relu() @ w2 + b2 in one pallas_call. Returns f32."""
    M, K = x.shape
    K1, H = w1_p.shape
    H2, Np = w2_p.shape
    assert K == K1 and H == H2
    tm = min(block_m, _round_up(M, 8))
    Mp = _round_up(M, tm)
    x = jnp.pad(x.astype(jnp.bfloat16), ((0, Mp - M), (0, 0)))

    out = pl.pallas_call(
        _fc_head_kernel,
        out_shape=jax.ShapeDtypeStruct((Mp, Np), jnp.float32),
        grid=(Mp // tm,),
        in_specs=[
            pl.BlockSpec((tm, K), lambda i: (i, 0)),
            pl.BlockSpec((K, H), lambda i: (0, 0)),
            pl.BlockSpec((1, H), lambda i: (0, 0)),
            pl.BlockSpec((H, Np), lambda i: (0, 0)),
            pl.BlockSpec((1, Np), lambda i: (0, 0)),
        ],
        out_specs=pl.BlockSpec((tm, Np), lambda i: (i, 0)),
        compiler_params=pltpu.CompilerParams(
            dimension_semantics=("parallel",)),
    )(x, w1_p, b1_p, w2_p, b2_p)
    return out[:M]


# -----------------------------------------------------------------------------
# Patch extraction (single XLA op; feature order (C, KH, KW) == torch flatten)
# -----------------------------------------------------------------------------
def _patches(x_nhwc, k, stride, pad):
    """NHWC -> (N*OH*OW, C*k*k); feature ordered (C, KH, KW), i.e. torch order."""
    n, h, w, c = x_nhwc.shape
    p = jax.lax.conv_general_dilated_patches(
        x_nhwc, (k, k), (stride, stride),
        padding=((pad, pad), (pad, pad)),
        dimension_numbers=("NHWC", "HWIO", "NHWC"))
    oh, ow = p.shape[1], p.shape[2]
    return p.reshape(n * oh * ow, c * k * k), oh, ow


# -----------------------------------------------------------------------------
# Parameter creation (torch layout) and one-time packing into padded bf16 panels
# -----------------------------------------------------------------------------
def conv_out_hw(h, w):
    h1 = (h + 4 - 8) // 4 + 1
    w1 = (w + 4 - 8) // 4 + 1
    h2 = (h1 + 2 - 4) // 2 + 1
    w2 = (w1 + 2 - 4) // 2 + 1
    h3 = (h2 + 2 - 3) // 1 + 1
    w3 = (w2 + 2 - 3) // 1 + 1
    return h3, w3


def init_torch_params(key, input_dim, output_dim):
    """Weights in PyTorch layouts (Conv2d: (Cout,Cin,KH,KW); Linear: (out,in))."""
    c_in, h, w = input_dim
    ks = jax.random.split(key, 10)
    s = 0.05
    h3, w3 = conv_out_hw(h, w)
    conv_out = CONV3_CHANNELS * h3 * w3
    return {
        "w1": jax.random.normal(ks[0], (32, c_in, 8, 8), jnp.float32) * s,
        "b1": jax.random.normal(ks[1], (32,), jnp.float32) * s,
        "w2": jax.random.normal(ks[2], (64, 32, 4, 4), jnp.float32) * s,
        "b2": jax.random.normal(ks[3], (64,), jnp.float32) * s,
        "w3": jax.random.normal(ks[4], (64, 64, 3, 3), jnp.float32) * s,
        "b3": jax.random.normal(ks[5], (64,), jnp.float32) * s,
        "w4": jax.random.normal(ks[6], (512, conv_out), jnp.float32) * s,
        "b4": jax.random.normal(ks[7], (512,), jnp.float32) * s,
        "w5": jax.random.normal(ks[8], (output_dim, 512), jnp.float32) * s,
        "b5": jax.random.normal(ks[9], (output_dim,), jnp.float32) * s,
    }


def _pack_conv(w, b, cin_pad):
    """(Cout,Cin,KH,KW) -> bf16 (cin_pad*KH*KW, Cout_pad128) panel + f32 (1,Cout_pad) bias."""
    cout, cin, kh, kw = w.shape
    cout_pad = _round_up(cout, LANE)
    wp = jnp.zeros((cout, cin_pad, kh, kw), jnp.float32).at[:, :cin].set(w)
    w2d = wp.reshape(cout, cin_pad * kh * kw).T               # torch (Cin,KH,KW) order
    w2d = jnp.zeros((cin_pad * kh * kw, cout_pad), jnp.float32).at[:, :cout].set(w2d)
    b2d = jnp.zeros((1, cout_pad), jnp.float32).at[0, :cout].set(b)
    return w2d.astype(jnp.bfloat16), b2d


def _pack_fc1(w4, b4, c, h3, w3):
    """Permute fc1 input axis from torch's (C,H,W) flatten to our (H,W,C) flatten."""
    hidden = w4.shape[0]
    w = w4.reshape(hidden, c, h3, w3).transpose(0, 2, 3, 1).reshape(hidden, h3 * w3 * c)
    hp = _round_up(hidden, LANE)
    wp = jnp.zeros((h3 * w3 * c, hp), jnp.float32).at[:, :hidden].set(w.T)
    bp = jnp.zeros((1, hp), jnp.float32).at[0, :hidden].set(b4)
    return wp.astype(jnp.bfloat16), bp


def _pack_fc2(w5, b5):
    out_dim, hidden = w5.shape
    np_ = _round_up(out_dim, LANE)
    wp = jnp.zeros((hidden, np_), jnp.float32).at[:, :out_dim].set(w5.T)
    bp = jnp.zeros((1, np_), jnp.float32).at[0, :out_dim].set(b5)
    return wp.astype(jnp.bfloat16), bp


def pack_params(p, input_dim):
    c_in, h, w = input_dim
    h3, w3 = conv_out_hw(h, w)
    w1, b1 = _pack_conv(p["w1"], p["b1"], cin_pad=c_in)   # raw input channels, unpadded
    w2, b2 = _pack_conv(p["w2"], p["b2"], cin_pad=LANE)   # prev act channels padded to 128
    w3p, b3p = _pack_conv(p["w3"], p["b3"], cin_pad=LANE)
    w4, b4 = _pack_fc1(p["w4"], p["b4"], CONV3_CHANNELS, h3, w3)
    w5, b5 = _pack_fc2(p["w5"], p["b5"])
    return dict(w1=w1, b1=b1, w2=w2, b2=b2, w3=w3p, b3=b3p,
                w4=w4, b4=b4, w5=w5, b5=b5)


# -----------------------------------------------------------------------------
# DQN forward (Pallas) and a pure-JAX f32 reference
# -----------------------------------------------------------------------------
def dqn_forward(packed, x, output_dim):
    n = x.shape[0]
    # Single layout op per forward: NCHW -> NHWC (lane-dense channels) + bf16 cast.
    x = jnp.transpose(x, (0, 2, 3, 1)).astype(jnp.bfloat16)

    p1, oh, ow = _patches(x, 8, 4, 2)
    y = pallas_dense(p1, packed["w1"], packed["b1"], apply_relu=True).reshape(n, oh, ow, LANE)

    p2, oh, ow = _patches(y, 4, 2, 1)
    y = pallas_dense(p2, packed["w2"], packed["b2"], apply_relu=True).reshape(n, oh, ow, LANE)

    p3, oh, ow = _patches(y, 3, 1, 1)
    y = pallas_dense(p3, packed["w3"], packed["b3"], apply_relu=True).reshape(n, oh, ow, LANE)

    # torch view(N, -1) equivalence: drop channel padding, flatten in (H,W,C) order
    # (fc1 weight was permuted at pack time to match this order).
    feat = y[:, :, :, :CONV3_CHANNELS].reshape(n, oh * ow * CONV3_CHANNELS)

    out = pallas_fc_head(feat, packed["w4"], packed["b4"], packed["w5"], packed["b5"])
    return out[:, :output_dim]


def reference_forward(p, x):
    def conv(x, w, b, stride, pad):
        y = jax.lax.conv_general_dilated(
            x, w, (stride, stride), ((pad, pad), (pad, pad)),
            dimension_numbers=("NCHW", "OIHW", "NCHW"))
        return jax.nn.relu(y + b[None, :, None, None])
    x = conv(x, p["w1"], p["b1"], 4, 2)
    x = conv(x, p["w2"], p["b2"], 2, 1)
    x = conv(x, p["w3"], p["b3"], 1, 1)
    x = x.reshape(x.shape[0], -1)
    x = jax.nn.relu(x @ p["w4"].T + p["b4"])
    return x @ p["w5"].T + p["b5"]


if __name__ == "__main__":
    key = jax.random.PRNGKey(0)
    k_param, k_x = jax.random.split(key)

    input_dim = (4, 16, 16)   # (channels, H, W) — small Atari-style frame stack
    output_dim = 4            # number of actions
    batch = 2

    torch_params = init_torch_params(k_param, input_dim, output_dim)
    packed = pack_params(torch_params, input_dim)        # one-time weight packing
    x = jax.random.normal(k_x, (batch, *input_dim), jnp.float32)

    fwd = jax.jit(dqn_forward, static_argnums=(2,))
    actions = jax.block_until_ready(fwd(packed, x, output_dim))

    assert actions.shape == (batch, output_dim), actions.shape
    assert bool(jnp.all(jnp.isfinite(actions)))

    # bf16 MXU matmuls vs f32 reference: generous tolerance.
    ref = reference_forward(torch_params, x)
    err = float(jnp.max(jnp.abs(actions - ref)))
    assert err < 5e-2, (err, actions, ref)

    print("KERNEL_OK")
</pallas_src>

<mosaic_0001>
module attributes {stable_mosaic.version = 11 : i64} {
  func.func @_matmul_bias_kernel(%arg0: i32, %arg1: memref<32x256xbf16, #tpu.memory_space<vmem>>, %arg2: memref<256x128xbf16, #tpu.memory_space<vmem>>, %arg3: memref<1x128xf32, #tpu.memory_space<vmem>>, %arg4: memref<32x128xbf16, #tpu.memory_space<vmem>>) attributes {dimension_semantics = [#tpu.dimension_semantics<parallel>], iteration_bounds = array<i64: 1>, scalar_prefetch = 0 : i64, scratch_operands = 0 : i64, tpu.core_type = #tpu.core_type<tc>, window_params = [{transform_indices = @transform_0, window_bounds = array<i64: 32, 256>}, {pipeline_mode = #tpu.pipeline_mode<synchronous>, transform_indices = @transform_1, window_bounds = array<i64: 256, 128>}, {pipeline_mode = #tpu.pipeline_mode<synchronous>, transform_indices = @transform_2, window_bounds = array<i64: 1, 128>}, {transform_indices = @transform_3, window_bounds = array<i64: 32, 128>}]} {
    %c0 = arith.constant 0 : index
    %c0_0 = arith.constant 0 : index
    %0 = vector.load %arg1[%c0, %c0_0] : memref<32x256xbf16, #tpu.memory_space<vmem>>, vector<32x256xbf16>
    %c0_1 = arith.constant 0 : index
    %c0_2 = arith.constant 0 : index
    %1 = vector.load %arg2[%c0_1, %c0_2] : memref<256x128xbf16, #tpu.memory_space<vmem>>, vector<256x128xbf16>
    %cst = arith.constant dense<0.000000e+00> : vector<32x128xf32>
    %2 = tpu.matmul %0, %1, %cst {dimension_numbers = #tpu.dot_dimension_numbers<[1], [0], [0], [1], [0, 0, 1, 1], [], []>} : vector<32x256xbf16>, vector<256x128xbf16>, vector<32x128xf32> -> vector<32x128xf32>
    %c0_3 = arith.constant 0 : index
    %c0_4 = arith.constant 0 : index
    %3 = vector.load %arg3[%c0_3, %c0_4] : memref<1x128xf32, #tpu.memory_space<vmem>>, vector<1x128xf32>
    %4 = vector.broadcast %3 : vector<1x128xf32> to vector<32x128xf32>
    %5 = arith.addf %2, %4 : vector<32x128xf32>
    %cst_5 = arith.constant 0.000000e+00 : f32
    %6 = vector.broadcast %cst_5 : f32 to vector<32x128xf32>
    %7 = arith.maximumf %5, %6 : vector<32x128xf32>
    %8 = arith.truncf %7 : vector<32x128xf32> to vector<32x128xbf16>
    %c0_6 = arith.constant 0 : index
    %c0_7 = arith.constant 0 : index
    %9 = vector.load %arg4[%c0_6, %c0_7] : memref<32x128xbf16, #tpu.memory_space<vmem>>, vector<32x128xbf16>
    tpu.vector_store %arg4[%c0_6, %c0_7], %8 {strides = array<i32>} : memref<32x128xbf16, #tpu.memory_space<vmem>>, vector<32x128xbf16>,
    return
  }
  func.func @transform_0(%arg0: i32) -> (i32, i32) {
    %c0_i32 = arith.constant 0 : i32
    %c0_i32_0 = arith.constant 0 : i32
    return %arg0, %c0_i32 : i32, i32
  }
  func.func @transform_1(%arg0: i32) -> (i32, i32) {
    %c0_i32 = arith.constant 0 : i32
    %c0_i32_0 = arith.constant 0 : i32
    %c0_i32_1 = arith.constant 0 : i32
    return %c0_i32, %c0_i32_0 : i32, i32
  }
  func.func @transform_2(%arg0: i32) -> (i32, i32) {
    %c0_i32 = arith.constant 0 : i32
    %c0_i32_0 = arith.constant 0 : i32
    %c0_i32_1 = arith.constant 0 : i32
    return %c0_i32, %c0_i32_0 : i32, i32
  }
  func.func @transform_3(%arg0: i32) -> (i32, i32) {
    %c0_i32 = arith.constant 0 : i32
    %c0_i32_0 = arith.constant 0 : i32
    return %arg0, %c0_i32 : i32, i32
  }
}

module attributes {stable_mosaic.version = 11 : i64} {
  func.func @_matmul_bias_kernel(%arg0: i32, %arg1: memref<8x2048xbf16, #tpu.memory_space<vmem>>, %arg2: memref<2048x128xbf16, #tpu.memory_space<vmem>>, %arg3: memref<1x128xf32, #tpu.memory_space<vmem>>, %arg4: memref<8x128xbf16, #tpu.memory_space<vmem>>) attributes {dimension_semantics = [#tpu.dimension_semantics<parallel>], iteration_bounds = array<i64: 1>, scalar_prefetch = 0 : i64, scratch_operands = 0 : i64, tpu.core_type = #tpu.core_type<tc>, window_params = [{transform_indices = @transform_0, window_bounds = array<i64: 8, 2048>}, {pipeline_mode = #tpu.pipeline_mode<synchronous>, transform_indices = @transform_1, window_bounds = array<i64: 2048, 128>}, {pipeline_mode = #tpu.pipeline_mode<synchronous>, transform_indices = @transform_2, window_bounds = array<i64: 1, 128>}, {transform_indices = @transform_3, window_bounds = array<i64: 8, 128>}]} {
    %c0 = arith.constant 0 : index
    %c0_0 = arith.constant 0 : index
    %0 = vector.load %arg1[%c0, %c0_0] : memref<8x2048xbf16, #tpu.memory_space<vmem>>, vector<8x2048xbf16>
    %c0_1 = arith.constant 0 : index
    %c0_2 = arith.constant 0 : index
    %1 = vector.load %arg2[%c0_1, %c0_2] : memref<2048x128xbf16, #tpu.memory_space<vmem>>, vector<2048x128xbf16>
    %cst = arith.constant dense<0.000000e+00> : vector<8x128xf32>
    %2 = tpu.matmul %0, %1, %cst {dimension_numbers = #tpu.dot_dimension_numbers<[1], [0], [0], [1], [0, 0, 1, 1], [], []>} : vector<8x2048xbf16>, vector<2048x128xbf16>, vector<8x128xf32> -> vector<8x128xf32>
    %c0_3 = arith.constant 0 : index
    %c0_4 = arith.constant 0 : index
    %3 = vector.load %arg3[%c0_3, %c0_4] : memref<1x128xf32, #tpu.memory_space<vmem>>, vector<1x128xf32>
    %4 = vector.broadcast %3 : vector<1x128xf32> to vector<8x128xf32>
    %5 = arith.addf %2, %4 : vector<8x128xf32>
    %cst_5 = arith.constant 0.000000e+00 : f32
    %6 = vector.broadcast %cst_5 : f32 to vector<8x128xf32>
    %7 = arith.maximumf %5, %6 : vector<8x128xf32>
    %8 = arith.truncf %7 : vector<8x128xf32> to vector<8x128xbf16>
    %c0_6 = arith.constant 0 : index
    %c0_7 = arith.constant 0 : index
    %9 = vector.load %arg4[%c0_6, %c0_7] : memref<8x128xbf16, #tpu.memory_space<vmem>>, vector<8x128xbf16>
    tpu.vector_store %arg4[%c0_6, %c0_7], %8 {strides = array<i32>} : memref<8x128xbf16, #tpu.memory_space<vmem>>, vector<8x128xbf16>,
    return
  }
  func.func @transform_0(%arg0: i32) -> (i32, i32) {
    %c0_i32 = arith.constant 0 : i32
    %c0_i32_0 = arith.constant 0 : i32
    return %arg0, %c0_i32 : i32, i32
  }
  func.func @transform_1(%arg0: i32) -> (i32, i32) {
    %c0_i32 = arith.constant 0 : i32
    %c0_i32_0 = arith.constant 0 : i32
    %c0_i32_1 = arith.constant 0 : i32
    return %c0_i32, %c0_i32_0 : i32, i32
  }
  func.func @transform_2(%arg0: i32) -> (i32, i32) {
    %c0_i32 = arith.constant 0 : i32
    %c0_i32_0 = arith.constant 0 : i32
    %c0_i32_1 = arith.constant 0 : i32
    return %c0_i32, %c0_i32_0 : i32, i32
  }
  func.func @transform_3(%arg0: i32) -> (i32, i32) {
    %c0_i32 = arith.constant 0 : i32
    %c0_i32_0 = arith.constant 0 : i32
    return %arg0, %c0_i32 : i32, i32
  }
}

module attributes {stable_mosaic.version = 11 : i64} {
  func.func @_matmul_bias_kernel(%arg0: i32, %arg1: memref<8x1152xbf16, #tpu.memory_space<vmem>>, %arg2: memref<1152x128xbf16, #tpu.memory_space<vmem>>, %arg3: memref<1x128xf32, #tpu.memory_space<vmem>>, %arg4: memref<8x128xbf16, #tpu.memory_space<vmem>>) attributes {dimension_semantics = [#tpu.dimension_semantics<parallel>], iteration_bounds = array<i64: 1>, scalar_prefetch = 0 : i64, scratch_operands = 0 : i64, tpu.core_type = #tpu.core_type<tc>, window_params = [{transform_indices = @transform_0, window_bounds = array<i64: 8, 1152>}, {pipeline_mode = #tpu.pipeline_mode<synchronous>, transform_indices = @transform_1, window_bounds = array<i64: 1152, 128>}, {pipeline_mode = #tpu.pipeline_mode<synchronous>, transform_indices = @transform_2, window_bounds = array<i64: 1, 128>}, {transform_indices = @transform_3, window_bounds = array<i64: 8, 128>}]} {
    %c0 = arith.constant 0 : index
    %c0_0 = arith.constant 0 : index
    %0 = vector.load %arg1[%c0, %c0_0] : memref<8x1152xbf16, #tpu.memory_space<vmem>>, vector<8x1152xbf16>
    %c0_1 = arith.constant 0 : index
    %c0_2 = arith.constant 0 : index
    %1 = vector.load %arg2[%c0_1, %c0_2] : memref<1152x128xbf16, #tpu.memory_space<vmem>>, vector<1152x128xbf16>
    %cst = arith.constant dense<0.000000e+00> : vector<8x128xf32>
    %2 = tpu.matmul %0, %1, %cst {dimension_numbers = #tpu.dot_dimension_numbers<[1], [0], [0], [1], [0, 0, 1, 1], [], []>} : vector<8x1152xbf16>, vector<1152x128xbf16>, vector<8x128xf32> -> vector<8x128xf32>
    %c0_3 = arith.constant 0 : index
    %c0_4 = arith.constant 0 : index
    %3 = vector.load %arg3[%c0_3, %c0_4] : memref<1x128xf32, #tpu.memory_space<vmem>>, vector<1x128xf32>
    %4 = vector.broadcast %3 : vector<1x128xf32> to vector<8x128xf32>
    %5 = arith.addf %2, %4 : vector<8x128xf32>
    %cst_5 = arith.constant 0.000000e+00 : f32
    %6 = vector.broadcast %cst_5 : f32 to vector<8x128xf32>
    %7 = arith.maximumf %5, %6 : vector<8x128xf32>
    %8 = arith.truncf %7 : vector<8x128xf32> to vector<8x128xbf16>
    %c0_6 = arith.constant 0 : index
    %c0_7 = arith.constant 0 : index
    %9 = vector.load %arg4[%c0_6, %c0_7] : memref<8x128xbf16, #tpu.memory_space<vmem>>, vector<8x128xbf16>
    tpu.vector_store %arg4[%c0_6, %c0_7], %8 {strides = array<i32>} : memref<8x128xbf16, #tpu.memory_space<vmem>>, vector<8x128xbf16>,
    return
  }
  func.func @transform_0(%arg0: i32) -> (i32, i32) {
    %c0_i32 = arith.constant 0 : i32
    %c0_i32_0 = arith.constant 0 : i32
    return %arg0, %c0_i32 : i32, i32
  }
  func.func @transform_1(%arg0: i32) -> (i32, i32) {
    %c0_i32 = arith.constant 0 : i32
    %c0_i32_0 = arith.constant 0 : i32
    %c0_i32_1 = arith.constant 0 : i32
    return %c0_i32, %c0_i32_0 : i32, i32
  }
  func.func @transform_2(%arg0: i32) -> (i32, i32) {
    %c0_i32 = arith.constant 0 : i32
    %c0_i32_0 = arith.constant 0 : i32
    %c0_i32_1 = arith.constant 0 : i32
    return %c0_i32, %c0_i32_0 : i32, i32
  }
  func.func @transform_3(%arg0: i32) -> (i32, i32) {
    %c0_i32 = arith.constant 0 : i32
    %c0_i32_0 = arith.constant 0 : i32
    return %arg0, %c0_i32 : i32, i32
  }
}

module attributes {stable_mosaic.version = 11 : i64} {
  func.func @_fc_head_kernel(%arg0: i32, %arg1: memref<8x256xbf16, #tpu.memory_space<vmem>>, %arg2: memref<256x512xbf16, #tpu.memory_space<vmem>>, %arg3: memref<1x512xf32, #tpu.memory_space<vmem>>, %arg4: memref<512x128xbf16, #tpu.memory_space<vmem>>, %arg5: memref<1x128xf32, #tpu.memory_space<vmem>>, %arg6: memref<8x128xf32, #tpu.memory_space<vmem>>) attributes {dimension_semantics = [#tpu.dimension_semantics<parallel>], iteration_bounds = array<i64: 1>, scalar_prefetch = 0 : i64, scratch_operands = 0 : i64, tpu.core_type = #tpu.core_type<tc>, window_params = [{transform_indices = @transform_0, window_bounds = array<i64: 8, 256>}, {pipeline_mode = #tpu.pipeline_mode<synchronous>, transform_indices = @transform_1, window_bounds = array<i64: 256, 512>}, {pipeline_mode = #tpu.pipeline_mode<synchronous>, transform_indices = @transform_2, window_bounds = array<i64: 1, 512>}, {pipeline_mode = #tpu.pipeline_mode<synchronous>, transform_indices = @transform_3, window_bounds = array<i64: 512, 128>}, {pipeline_mode = #tpu.pipeline_mode<synchronous>, transform_indices = @transform_4, window_bounds = array<i64: 1, 128>}, {transform_indices = @transform_5, window_bounds = array<i64: 8, 128>}]} {
    %c0 = arith.constant 0 : index
    %c0_0 = arith.constant 0 : index
    %0 = vector.load %arg1[%c0, %c0_0] : memref<8x256xbf16, #tpu.memory_space<vmem>>, vector<8x256xbf16>
    %c0_1 = arith.constant 0 : index
    %c0_2 = arith.constant 0 : index
    %1 = vector.load %arg2[%c0_1, %c0_2] : memref<256x512xbf16, #tpu.memory_space<vmem>>, vector<256x512xbf16>
    %cst = arith.constant dense<0.000000e+00> : vector<8x512xf32>
    %2 = tpu.matmul %0, %1, %cst {dimension_numbers = #tpu.dot_dimension_numbers<[1], [0], [0], [1], [0, 0, 1, 1], [], []>} : vector<8x256xbf16>, vector<256x512xbf16>, vector<8x512xf32> -> vector<8x512xf32>
    %c0_3 = arith.constant 0 : index
    %c0_4 = arith.constant 0 : index
    %3 = vector.load %arg3[%c0_3, %c0_4] : memref<1x512xf32, #tpu.memory_space<vmem>>, vector<1x512xf32>
    %4 = vector.broadcast %3 : vector<1x512xf32> to vector<8x512xf32>
    %5 = arith.addf %2, %4 : vector<8x512xf32>
    %cst_5 = arith.constant 0.000000e+00 : f32
    %6 = vector.broadcast %cst_5 : f32 to vector<8x512xf32>
    %7 = arith.maximumf %5, %6 : vector<8x512xf32>
    %8 = arith.truncf %7 : vector<8x512xf32> to vector<8x512xbf16>
    %c0_6 = arith.constant 0 : index
    %c0_7 = arith.constant 0 : index
    %9 = vector.load %arg4[%c0_6, %c0_7] : memref<512x128xbf16, #tpu.memory_space<vmem>>, vector<512x128xbf16>
    %cst_8 = arith.constant dense<0.000000e+00> : vector<8x128xf32>
    %10 = tpu.matmul %8, %9, %cst_8 {dimension_numbers = #tpu.dot_dimension_numbers<[1], [0], [0], [1], [0, 0, 1, 1], [], []>} : vector<8x512xbf16>, vector<512x128xbf16>, vector<8x128xf32> -> vector<8x128xf32>
    %c0_9 = arith.constant 0 : index
    %c0_10 = arith.constant 0 : index
    %11 = vector.load %arg5[%c0_9, %c0_10] : memref<1x128xf32, #tpu.memory_space<vmem>>, vector<1x128xf32>
    %12 = vector.broadcast %11 : vector<1x128xf32> to vector<8x128xf32>
    %13 = arith.addf %10, %12 : vector<8x128xf32>
    %c0_11 = arith.constant 0 : index
    %c0_12 = arith.constant 0 : index
    %14 = vector.load %arg6[%c0_11, %c0_12] : memref<8x128xf32, #tpu.memory_space<vmem>>, vector<8x128xf32>
    tpu.vector_store %arg6[%c0_11, %c0_12], %13 {strides = array<i32>} : memref<8x128xf32, #tpu.memory_space<vmem>>, vector<8x128xf32>,
    return
  }
  func.func @transform_0(%arg0: i32) -> (i32, i32) {
    %c0_i32 = arith.constant 0 : i32
    %c0_i32_0 = arith.constant 0 : i32
    return %arg0, %c0_i32 : i32, i32
  }
  func.func @transform_1(%arg0: i32) -> (i32, i32) {
    %c0_i32 = arith.constant 0 : i32
    %c0_i32_0 = arith.constant 0 : i32
    %c0_i32_1 = arith.constant 0 : i32
    return %c0_i32, %c0_i32_0 : i32, i32
  }
  func.func @transform_2(%arg0: i32) -> (i32, i32) {
    %c0_i32 = arith.constant 0 : i32
    %c0_i32_0 = arith.constant 0 : i32
    %c0_i32_1 = arith.constant 0 : i32
    return %c0_i32, %c0_i32_0 : i32, i32
  }
  func.func @transform_3(%arg0: i32) -> (i32, i32) {
    %c0_i32 = arith.constant 0 : i32
    %c0_i32_0 = arith.constant 0 : i32
    %c0_i32_1 = arith.constant 0 : i32
    return %c0_i32, %c0_i32_0 : i32, i32
  }
  func.func @transform_4(%arg0: i32) -> (i32, i32) {
    %c0_i32 = arith.constant 0 : i32
    %c0_i32_0 = arith.constant 0 : i32
    %c0_i32_1 = arith.constant 0 : i32
    return %c0_i32, %c0_i32_0 : i32, i32
  }
  func.func @transform_5(%arg0: i32) -> (i32, i32) {
    %c0_i32 = arith.constant 0 : i32
    %c0_i32_0 = arith.constant 0 : i32
    return %arg0, %c0_i32 : i32, i32
  }
}

</mosaic_0001>

<llo_original>
// kernel: dqn_forward.4
$region0: #{dqn_forward.4}
  #allocation0 [shape = 'u32[]', space=smem, size = 0x4, offset = 0x4, fixed_abs, tag = 'smem constant byte address 0x4 - core index']
  #allocation1 [shape = 'u32[144,128]{1,0:T(1,128)}', space=vmem, size = 0x12000, scoped, tag = 'internal scratch']
  %s0 = inlined_call_operand.vmem [shape: bf16[32,256], index: 0, kind: input, shape index: {}]
  %s1 = inlined_call_operand.vmem [shape: bf16[256,128], index: 1, kind: input, shape index: {}]
  %s2 = inlined_call_operand.vmem [shape: f32[1,128], index: 2, kind: input, shape index: {}]
  %s3 = inlined_call_operand.vmem [shape: bf16[32,128], index: 3, kind: output, shape index: {}]
  %s4 = sld [smem:[#allocation0]]
  $region22: #{dqn_forward.4} parent=0
    _
  %s6 = ssub.s32 1, %s4
  %s7 = scalar_select 0, %s6, %s4
  // Predicated region
  $region2: #{dqn_forward.4} parent=0 // pred_check
    _
  $region3: #{dqn_forward.4} parent=0 // pred_check_branch
    %9 = sbr.rel (0) target = $region5
  $region4: #{dqn_forward.4} parent=0 // pred_region
    _
  $region5: #{dqn_forward.4} parent=0 // pred_fallthru
    _
  // Predicated region
  $region6: #{dqn_forward.4} parent=0 // pred_check
    _
  $region7: #{dqn_forward.4} parent=0 // pred_check_branch
    %11 = sbr.rel (0) target = $region9
  $region8: #{dqn_forward.4} parent=0 // pred_region
    _
  $region9: #{dqn_forward.4} parent=0 // pred_fallthru
    _
  // Predicated region
  $region10: #{dqn_forward.4} parent=0 // pred_check
    _
  $region11: #{dqn_forward.4} parent=0 // pred_check_branch
    %13 = sbr.rel (0) target = $region13
  $region12: #{dqn_forward.4} parent=0 // pred_region
    _
  $region13: #{dqn_forward.4} parent=0 // pred_fallthru
    _
  %v15 = vld [vmem:[%s0] sm:$0xff]
  %v16 = vld [vmem:[%s0 + $0x8] sm:$0xff]
  %v17 = vld [vmem:[%s0 + $0x10] sm:$0xff]
  %v18 = vld [vmem:[%s0 + $0x18] sm:$0xff]
  %v19 = vld [vmem:[%s1] sm:$0xf]
  %v20 = vld [vmem:[%s1 + $0x4] sm:$0xf]
  %v21 = vld [vmem:[%s1 + $0x8] sm:$0xf]
  %v22 = vld [vmem:[%s1 + $0xc] sm:$0xf]
  %v23 = vld [vmem:[%s1 + $0x10] sm:$0xf]
  %v24 = vld [vmem:[%s1 + $0x14] sm:$0xf]
  %v25 = vld [vmem:[%s1 + $0x18] sm:$0xf]
  %v26 = vld [vmem:[%s1 + $0x1c] sm:$0xf]
  %v27 = vld [vmem:[%s1 + $0x20] sm:$0xf]
  %v28 = vld [vmem:[%s1 + $0x24] sm:$0xf]
  %v29 = vld [vmem:[%s1 + $0x28] sm:$0xf]
  %v30 = vld [vmem:[%s1 + $0x2c] sm:$0xf]
  %v31 = vld [vmem:[%s1 + $0x30] sm:$0xf]
  %v32 = vld [vmem:[%s1 + $0x34] sm:$0xf]
  %v33 = vld [vmem:[%s1 + $0x38] sm:$0xf]
  %v34 = vld [vmem:[%s1 + $0x3c] sm:$0xf]
  %v35 = vld [vmem:[%s1 + $0x40] sm:$0xf]
  %v36 = vld [vmem:[%s1 + $0x44] sm:$0xf]
  %v37 = vld [vmem:[%s1 + $0x48] sm:$0xf]
  %v38 = vld [vmem:[%s1 + $0x4c] sm:$0xf]
  %v39 = vld [vmem:[%s1 + $0x50] sm:$0xf]
  %v40 = vld [vmem:[%s1 + $0x54] sm:$0xf]
  %v41 = vld [vmem:[%s1 + $0x58] sm:$0xf]
  %v42 = vld [vmem:[%s1 + $0x5c] sm:$0xf]
  %v43 = vld [vmem:[%s1 + $0x60] sm:$0xf]
  %v44 = vld [vmem:[%s1 + $0x64] sm:$0xf]
  %v45 = vld [vmem:[%s1 + $0x68] sm:$0xf]
  %v46 = vld [vmem:[%s1 + $0x6c] sm:$0xf]
  %v47 = vld [vmem:[%s1 + $0x70] sm:$0xf]
  %v48 = vld [vmem:[%s1 + $0x74] sm:$0xf]
  %v49 = vld [vmem:[%s1 + $0x78] sm:$0xf]
  %v50 = vld [vmem:[%s1 + $0x7c] sm:$0xf]
  %v51 = vld [vmem:[%s2] sm:$0x1]
  %v53 = vlaneseq
  %v54 = vshrl.u32 %v53, 7
  %v55 = vsub.s32 0, %v54
  %v56 = vrot.slane %v51, %v55
  %v62 = vunpack.c.l.b16 %v15
  %v63 = vunpack.c.h.b16 %v15
  %v64 = vunpack.c.l.b16 %v16
  %v65 = vunpack.c.h.b16 %v16
  %v66 = vunpack.c.l.b16 %v17
  %v67 = vunpack.c.h.b16 %v17
  %v68 = vunpack.c.l.b16 %v18
  %v69 = vunpack.c.h.b16 %v18
  %v70 = vpack.c.b16 %v64, %v62
  %v71 = vpack.c.b16 %v65, %v63
  %v72 = vpack.c.b16 %v68, %v66
  %v73 = vpack.c.b16 %v69, %v67
  %v110 = vunpack.c.l.b16 %v19
  %v111 = vunpack.c.l.b16 %v20
  %v112 = vunpack.c.l.b16 %v21
  %v113 = vunpack.c.l.b16 %v22
  %v114 = vunpack.c.l.b16 %v23
  %v115 = vunpack.c.l.b16 %v24
  %v116 = vunpack.c.l.b16 %v25
  %v117 = vunpack.c.l.b16 %v26
  %v118 = vunpack.c.l.b16 %v27
  %v119 = vunpack.c.l.b16 %v28
  %v120 = vunpack.c.l.b16 %v29
  %v121 = vunpack.c.l.b16 %v30
  %v122 = vunpack.c.l.b16 %v31
  %v123 = vunpack.c.l.b16 %v32
  %v124 = vunpack.c.l.b16 %v33
  %v125 = vunpack.c.l.b16 %v34
  %v126 = vunpack.c.l.b16 %v35
  %v127 = vunpack.c.l.b16 %v36
  %v128 = vunpack.c.l.b16 %v37
  %v129 = vunpack.c.l.b16 %v38
  %v130 = vunpack.c.l.b16 %v39
  %v131 = vunpack.c.l.b16 %v40
  %v132 = vunpack.c.l.b16 %v41
  %v133 = vunpack.c.l.b16 %v42
  %v134 = vunpack.c.l.b16 %v43
  %v135 = vunpack.c.l.b16 %v44
  %v136 = vunpack.c.l.b16 %v45
  %v137 = vunpack.c.l.b16 %v46
  %v138 = vunpack.c.l.b16 %v47
  %v139 = vunpack.c.l.b16 %v48
  %v140 = vunpack.c.l.b16 %v49
  %v141 = vunpack.c.l.b16 %v50
  %v142 = vpack.c.b16 %v111, %v110
  %v143 = vpack.c.b16 %v113, %v112
  %v144 = vpack.c.b16 %v115, %v114
  %v145 = vpack.c.b16 %v117, %v116
  %v146 = vpack.c.b16 %v119, %v118
  %v147 = vpack.c.b16 %v121, %v120
  %v148 = vpack.c.b16 %v123, %v122
  %v149 = vpack.c.b16 %v125, %v124
  %v150 = vpack.c.b16 %v127, %v126
  %v151 = vpack.c.b16 %v129, %v128
  %v152 = vpack.c.b16 %v131, %v130
  %v153 = vpack.c.b16 %v133, %v132
  %v154 = vpack.c.b16 %v135, %v134
  %v155 = vpack.c.b16 %v137, %v136
  %v156 = vpack.c.b16 %v139, %v138
  %v157 = vpack.c.b16 %v141, %v140
  %174 = vmatprep.subr.bf16.mxu0 0
  %175 = vmatpush1.bf16.msra.mxu0 %v142
  %176 = vmatprep.subr.bf16.mxu0 0
  %177 = vmatpush1.bf16.msra.mxu0 %v143
  %178 = vmatprep.subr.bf16.mxu0 0
  %179 = vmatpush1.bf16.msra.mxu0 %v144
  %180 = vmatprep.subr.bf16.mxu0 0
  %181 = vmatpush1.bf16.msra.mxu0 %v145
  %182 = vmatprep.subr.bf16.mxu0 0
  %183 = vmatpush1.bf16.msra.mxu0 %v146
  %184 = vmatprep.subr.bf16.mxu0 0
  %185 = vmatpush1.bf16.msra.mxu0 %v147
  %186 = vmatprep.subr.bf16.mxu0 0
  %187 = vmatpush1.bf16.msra.mxu0 %v148
  %188 = vmatprep.subr.bf16.mxu0 0
  %189 = vmatpush1.bf16.msra.mxu0 %v149
  %190 = vmatprep.subr.bf16.mxu0 0
  %191 = vmatpush1.bf16.msra.mxu0 %v150
  %192 = vmatprep.subr.bf16.mxu0 0
  %193 = vmatpush1.bf16.msra.mxu0 %v151
  %194 = vmatprep.subr.bf16.mxu0 0
  %195 = vmatpush1.bf16.msra.mxu0 %v152
  %196 = vmatprep.subr.bf16.mxu0 0
  %197 = vmatpush1.bf16.msra.mxu0 %v153
  %198 = vmatprep.subr.bf16.mxu0 0
  %199 = vmatpush1.bf16.msra.mxu0 %v154
  %200 = vmatprep.subr.bf16.mxu0 0
  %201 = vmatpush1.bf16.msra.mxu0 %v155
  %202 = vmatprep.subr.bf16.mxu0 0
  %203 = vmatpush1.bf16.msra.mxu0 %v156
  %204 = vmatprep.subr.bf16.mxu0 0
  %205 = vmatpush1.bf16.msra.mxu0 %v157
  %206 = vmatprep.mubr.bf16.mxu0 %v71
  %207 = vmatmul.mubr.bf16.gmra.mrb[0].mxu0 %v70
  %v208 = vpop.f32.mrb[0].mxu0
  %v209 = vadd.f32 %v56, %v208
  %v210 = vpop.f32.mrb[0].mxu0
  %v211 = vpop.f32.mrb[0].mxu0
  %v212 = vadd.f32 %v56, %v211
  %v213 = vpop.f32.mrb[0].mxu0
  %214 = vmatprep.mubr.bf16.mxu0 %v73
  %215 = vmatmul.mubr.bf16.gmra.mrb[0].mxu0 %v72
  %v216 = vpop.f32.mrb[0].mxu0
  %v217 = vadd.f32 %v56, %v216
  %v218 = vpop.f32.mrb[0].mxu0
  %v219 = vpop.f32.mrb[0].mxu0
  %v220 = vadd.f32 %v56, %v219
  %v221 = vpop.f32.mrb[0].mxu0
  %222 = vdwg.mxu0
  %v223 = vmax.f32 %v209, 0.0
  %v224 = vmax.f32 %v212, 0.0
  %v225 = vmax.f32 %v217, 0.0
  %v226 = vmax.f32 %v220, 0.0
  %v227 = vpack.c.bf16 %v224, %v223
  %v228 = vpack.c.bf16 %v226, %v225
  %v231 = vunpack.c.l.b16 %v227
  %v232 = vunpack.c.h.b16 %v227
  %v233 = vunpack.c.l.b16 %v228
  %v234 = vunpack.c.h.b16 %v228
  %v235 = vpack.c.b16 %v231, %v231
  %v236 = vpack.c.b16 %v232, %v232
  %v237 = vpack.c.b16 %v233, %v233
  %v238 = vpack.c.b16 %v234, %v234
  %243 = vst [vmem:[%s3] sm:$0xf] %v235
  %244 = vst [vmem:[%s3 + $0x4] sm:$0xf] %v236
  %245 = vst [vmem:[%s3 + $0x8] sm:$0xf] %v237
  %246 = vst [vmem:[%s3 + $0xc] sm:$0xf] %v238
  // Predicated region
  $region14: #{dqn_forward.4} parent=0 // pred_check
    _
  $region15: #{dqn_forward.4} parent=0 // pred_check_branch
    %248 = sbr.rel (0) target = $region17
  $region16: #{dqn_forward.4} parent=0 // pred_region
    _
  $region17: #{dqn_forward.4} parent=0 // pred_fallthru
    _
  // Predicated region
  $region18: #{dqn_forward.4} parent=0 // pred_check
    _
  $region19: #{dqn_forward.4} parent=0 // pred_check_branch
    %250 = sbr.rel (0) target = $region21
  $region20: #{dqn_forward.4} parent=0 // pred_region
    _
  $region21: #{dqn_forward.4} parent=0 // pred_fallthru
    _

// kernel: dqn_forward.5
$region0: #{dqn_forward.5}
  #allocation0 [shape = 'u32[]', space=smem, size = 0x4, offset = 0x4, fixed_abs, tag = 'smem constant byte address 0x4 - core index']
  #allocation1 [shape = 'u32[144,128]{1,0:T(1,128)}', space=vmem, size = 0x12000, scoped, tag = 'internal scratch']
  %s0 = inlined_call_operand.vmem [shape: bf16[8,2048], index: 0, kind: input, shape index: {}]
  %s1 = inlined_call_operand.vmem [shape: bf16[2048,128], index: 1, kind: input, shape index: {}]
  %s2 = inlined_call_operand.vmem [shape: f32[1,128], index: 2, kind: input, shape index: {}]
  %s3 = inlined_call_operand.vmem [shape: bf16[8,128], index: 3, kind: output, shape index: {}]
  %s4 = sld [smem:[#allocation0]]
  $region22: #{dqn_forward.5} parent=0
    _
  %s6 = ssub.s32 1, %s4
  %s7 = scalar_select 0, %s6, %s4
  // Predicated region
  $region2: #{dqn_forward.5} parent=0 // pred_check
    _
  $region3: #{dqn_forward.5} parent=0 // pred_check_branch
    %9 = sbr.rel (0) target = $region5
  $region4: #{dqn_forward.5} parent=0 // pred_region
    _
  $region5: #{dqn_forward.5} parent=0 // pred_fallthru
    _
  // Predicated region
  $region6: #{dqn_forward.5} parent=0 // pred_check
    _
  $region7: #{dqn_forward.5} parent=0 // pred_check_branch
    %11 = sbr.rel (0) target = $region9
  $region8: #{dqn_forward.5} parent=0 // pred_region
    _
  $region9: #{dqn_forward.5} parent=0 // pred_fallthru
    _
  // Predicated region
  $region10: #{dqn_forward.5} parent=0 // pred_check
    _
  $region11: #{dqn_forward.5} parent=0 // pred_check_branch
    %13 = sbr.rel (0) target = $region13
  $region12: #{dqn_forward.5} parent=0 // pred_region
    _
  $region13: #{dqn_forward.5} parent=0 // pred_fallthru
    _
  %v15 = vld [vmem:[%s0] sm:$0xff]
  %v16 = vld [vmem:[%s0 + $0x8] sm:$0xff]
  %v17 = vld [vmem:[%s0 + $0x10] sm:$0xff]
  %v18 = vld [vmem:[%s0 + $0x18] sm:$0xff]
  %v19 = vld [vmem:[%s0 + $0x20] sm:$0xff]
  %v20 = vld [vmem:[%s0 + $0x28] sm:$0xff]
  %v21 = vld [vmem:[%s0 + $0x30] sm:$0xff]
  %v22 = vld [vmem:[%s0 + $0x38] sm:$0xff]
  %v23 = vld [vmem:[%s1] sm:$0xf]
  %v24 = vld [vmem:[%s1 + $0x4] sm:$0xf]
  %v25 = vld [vmem:[%s1 + $0x8] sm:$0xf]
  %v26 = vld [vmem:[%s1 + $0xc] sm:$0xf]
  %v27 = vld [vmem:[%s1 + $0x10] sm:$0xf]
  %v28 = vld [vmem:[%s1 + $0x14] sm:$0xf]
  %v29 = vld [vmem:[%s1 + $0x18] sm:$0xf]
  %v30 = vld [vmem:[%s1 + $0x1c] sm:$0xf]
  %v31 = vld [vmem:[%s1 + $0x20] sm:$0xf]
  %v32 = vld [vmem:[%s1 + $0x24] sm:$0xf]
  %v33 = vld [vmem:[%s1 + $0x28] sm:$0xf]
  %v34 = vld [vmem:[%s1 + $0x2c] sm:$0xf]
  %v35 = vld [vmem:[%s1 + $0x30] sm:$0xf]
  %v36 = vld [vmem:[%s1 + $0x34] sm:$0xf]
  %v37 = vld [vmem:[%s1 + $0x38] sm:$0xf]
  %v38 = vld [vmem:[%s1 + $0x3c] sm:$0xf]
  %v39 = vld [vmem:[%s1 + $0x40] sm:$0xf]
  %v40 = vld [vmem:[%s1 + $0x44] sm:$0xf]
  %v41 = vld [vmem:[%s1 + $0x48] sm:$0xf]
  %v42 = vld [vmem:[%s1 + $0x4c] sm:$0xf]
  %v43 = vld [vmem:[%s1 + $0x50] sm:$0xf]
  %v44 = vld [vmem:[%s1 + $0x54] sm:$0xf]
  %v45 = vld [vmem:[%s1 + $0x58] sm:$0xf]
  %v46 = vld [vmem:[%s1 + $0x5c] sm:$0xf]
  %v47 = vld [vmem:[%s1 + $0x60] sm:$0xf]
  %v48 = vld [vmem:[%s1 + $0x64] sm:$0xf]
  %v49 = vld [vmem:[%s1 + $0x68] sm:$0xf]
  %v50 = vld [vmem:[%s1 + $0x6c] sm:$0xf]
  %v51 = vld [vmem:[%s1 + $0x70] sm:$0xf]
  %v52 = vld [vmem:[%s1 + $0x74] sm:$0xf]
  %v53 = vld [vmem:[%s1 + $0x78] sm:$0xf]
  %v54 = vld [vmem:[%s1 + $0x7c] sm:$0xf]
  %v55 = vld [vmem:[%s1 + $0x80] sm:$0xf]
  %v56 = vld [vmem:[%s1 + $0x84] sm:$0xf]
  %v57 = vld [vmem:[%s1 + $0x88] sm:$0xf]
  %v58 = vld [vmem:[%s1 + $0x8c] sm:$0xf]
  %v59 = vld [vmem:[%s1 + $0x90] sm:$0xf]
  %v60 = vld [vmem:[%s1 + $0x94] sm:$0xf]
  %v61 = vld [vmem:[%s1 + $0x98] sm:$0xf]
  %v62 = vld [vmem:[%s1 + $0x9c] sm:$0xf]
  %v63 = vld [vmem:[%s1 + $0xa0] sm:$0xf]
  %v64 = vld [vmem:[%s1 + $0xa4] sm:$0xf]
  %v65 = vld [vmem:[%s1 + $0xa8] sm:$0xf]
  %v66 = vld [vmem:[%s1 + $0xac] sm:$0xf]
  %v67 = vld [vmem:[%s1 + $0xb0] sm:$0xf]
  %v68 = vld [vmem:[%s1 + $0xb4] sm:$0xf]
  %v69 = vld [vmem:[%s1 + $0xb8] sm:$0xf]
  %v70 = vld [vmem:[%s1 + $0xbc] sm:$0xf]
  %v71 = vld [vmem:[%s1 + $0xc0] sm:$0xf]
  %v72 = vld [vmem:[%s1 + $0xc4] sm:$0xf]
  %v73 = vld [vmem:[%s1 + $0xc8] sm:$0xf]
  %v74 = vld [vmem:[%s1 + $0xcc] sm:$0xf]
  %v75 = vld [vmem:[%s1 + $0xd0] sm:$0xf]
  %v76 = vld [vmem:[%s1 + $0xd4] sm:$0xf]
  %v77 = vld [vmem:[%s1 + $0xd8] sm:$0xf]
  %v78 = vld [vmem:[%s1 + $0xdc] sm:$0xf]
  %v79 = vld [vmem:[%s1 + $0xe0] sm:$0xf]
  %v80 = vld [vmem:[%s1 + $0xe4] sm:$0xf]
  %v81 = vld [vmem:[%s1 + $0xe8] sm:$0xf]
  %v82 = vld [vmem:[%s1 + $0xec] sm:$0xf]
  %v83 = vld [vmem:[%s1 + $0xf0] sm:$0xf]
  %v84 = vld [vmem:[%s1 + $0xf4] sm:$0xf]
  %v85 = vld [vmem:[%s1 + $0xf8] sm:$0xf]
  %v86 = vld [vmem:[%s1 + $0xfc] sm:$0xf]
  %v87 = vld [vmem:[%s1 + $0x100] sm:$0xf]
  %v88 = vld [vmem:[%s1 + $0x104] sm:$0xf]
  %v89 = vld [vmem:[%s1 + $0x108] sm:$0xf]
  %v90 = vld [vmem:[%s1 + $0x10c] sm:$0xf]
  %v91 = vld [vmem:[%s1 + $0x110] sm:$0xf]
  %v92 = vld [vmem:[%s1 + $0x114] sm:$0xf]
  %v93 = vld [vmem:[%s1 + $0x118] sm:$0xf]
  %v94 = vld [vmem:[%s1 + $0x11c] sm:$0xf]
  %v95 = vld [vmem:[%s1 + $0x120] sm:$0xf]
  %v96 = vld [vmem:[%s1 + $0x124] sm:$0xf]
  %v97 = vld [vmem:[%s1 + $0x128] sm:$0xf]
  %v98 = vld [vmem:[%s1 + $0x12c] sm:$0xf]
  %v99 = vld [vmem:[%s1 + $0x130] sm:$0xf]
  %v100 = vld [vmem:[%s1 + $0x134] sm:$0xf]
  %v101 = vld [vmem:[%s1 + $0x138] sm:$0xf]
  %v102 = vld [vmem:[%s1 + $0x13c] sm:$0xf]
  %v103 = vld [vmem:[%s1 + $0x140] sm:$0xf]
  %v104 = vld [vmem:[%s1 + $0x144] sm:$0xf]
  %v105 = vld [vmem:[%s1 + $0x148] sm:$0xf]
  %v106 = vld [vmem:[%s1 + $0x14c] sm:$0xf]
  %v107 = vld [vmem:[%s1 + $0x150] sm:$0xf]
  %v108 = vld [vmem:[%s1 + $0x154] sm:$0xf]
  %v109 = vld [vmem:[%s1 + $0x158] sm:$0xf]
  %v110 = vld [vmem:[%s1 + $0x15c] sm:$0xf]
  %v111 = vld [vmem:[%s1 + $0x160] sm:$0xf]
  %v112 = vld [vmem:[%s1 + $0x164] sm:$0xf]
  %v113 = vld [vmem:[%s1 + $0x168] sm:$0xf]
  %v114 = vld [vmem:[%s1 + $0x16c] sm:$0xf]
  %v115 = vld [vmem:[%s1 + $0x170] sm:$0xf]
  %v116 = vld [vmem:[%s1 + $0x174] sm:$0xf]
  %v117 = vld [vmem:[%s1 + $0x178] sm:$0xf]
  %v118 = vld [vmem:[%s1 + $0x17c] sm:$0xf]
  %v119 = vld [vmem:[%s1 + $0x180] sm:$0xf]
  %v120 = vld [vmem:[%s1 + $0x184] sm:$0xf]
  %v121 = vld [vmem:[%s1 + $0x188] sm:$0xf]
  %v122 = vld [vmem:[%s1 + $0x18c] sm:$0xf]
  %v123 = vld [vmem:[%s1 + $0x190] sm:$0xf]
  %v124 = vld [vmem:[%s1 + $0x194] sm:$0xf]
  %v125 = vld [vmem:[%s1 + $0x198] sm:$0xf]
  %v126 = vld [vmem:[%s1 + $0x19c] sm:$0xf]
  %v127 = vld [vmem:[%s1 + $0x1a0] sm:$0xf]
  %v128 = vld [vmem:[%s1 + $0x1a4] sm:$0xf]
  %v129 = vld [vmem:[%s1 + $0x1a8] sm:$0xf]
  %v130 = vld [vmem:[%s1 + $0x1ac] sm:$0xf]
  %v131 = vld [vmem:[%s1 + $0x1b0] sm:$0xf]
  %v132 = vld [vmem:[%s1 + $0x1b4] sm:$0xf]
  %v133 = vld [vmem:[%s1 + $0x1b8] sm:$0xf]
  %v134 = vld [vmem:[%s1 + $0x1bc] sm:$0xf]
  %v135 = vld [vmem:[%s1 + $0x1c0] sm:$0xf]
  %v136 = vld [vmem:[%s1 + $0x1c4] sm:$0xf]
  %v137 = vld [vmem:[%s1 + $0x1c8] sm:$0xf]
  %v138 = vld [vmem:[%s1 + $0x1cc] sm:$0xf]
  %v139 = vld [vmem:[%s1 + $0x1d0] sm:$0xf]
  %v140 = vld [vmem:[%s1 + $0x1d4] sm:$0xf]
  %v141 = vld [vmem:[%s1 + $0x1d8] sm:$0xf]
  %v142 = vld [vmem:[%s1 + $0x1dc] sm:$0xf]
  %v143 = vld [vmem:[%s1 + $0x1e0] sm:$0xf]
  %v144 = vld [vmem:[%s1 + $0x1e4] sm:$0xf]
  %v145 = vld [vmem:[%s1 + $0x1e8] sm:$0xf]
  %v146 = vld [vmem:[%s1 + $0x1ec] sm:$0xf]
  %v147 = vld [vmem:[%s1 + $0x1f0] sm:$0xf]
  %v148 = vld [vmem:[%s1 + $0x1f4] sm:$0xf]
  %v149 = vld [vmem:[%s1 + $0x1f8] sm:$0xf]
  %v150 = vld [vmem:[%s1 + $0x1fc] sm:$0xf]
  %v151 = vld [vmem:[%s1 + $0x200] sm:$0xf]
  %v152 = vld [vmem:[%s1 + $0x204] sm:$0xf]
  %v153 = vld [vmem:[%s1 + $0x208] sm:$0xf]
  %v154 = vld [vmem:[%s1 + $0x20c] sm:$0xf]
  %v155 = vld [vmem:[%s1 + $0x210] sm:$0xf]
  %v156 = vld [vmem:[%s1 + $0x214] sm:$0xf]
  %v157 = vld [vmem:[%s1 + $0x218] sm:$0xf]
  %v158 = vld [vmem:[%s1 + $0x21c] sm:$0xf]
  %v159 = vld [vmem:[%s1 + $0x220] sm:$0xf]
  %v160 = vld [vmem:[%s1 + $0x224] sm:$0xf]
  %v161 = vld [vmem:[%s1 + $0x228] sm:$0xf]
  %v162 = vld [vmem:[%s1 + $0x22c] sm:$0xf]
  %v163 = vld [vmem:[%s1 + $0x230] sm:$0xf]
  %v164 = vld [vmem:[%s1 + $0x234] sm:$0xf]
  %v165 = vld [vmem:[%s1 + $0x238] sm:$0xf]
  %v166 = vld [vmem:[%s1 + $0x23c] sm:$0xf]
  %v167 = vld [vmem:[%s1 + $0x240] sm:$0xf]
  %v168 = vld [vmem:[%s1 + $0x244] sm:$0xf]
  %v169 = vld [vmem:[%s1 + $0x248] sm:$0xf]
  %v170 = vld [vmem:[%s1 + $0x24c] sm:$0xf]
  %v171 = vld [vmem:[%s1 + $0x250] sm:$0xf]
  %v172 = vld [vmem:[%s1 + $0x254] sm:$0xf]
  %v173 = vld [vmem:[%s1 + $0x258] sm:$0xf]
  %v174 = vld [vmem:[%s1 + $0x25c] sm:$0xf]
  %v175 = vld [vmem:[%s1 + $0x260] sm:$0xf]
  %v176 = vld [vmem:[%s1 + $0x264] sm:$0xf]
  %v177 = vld [vmem:[%s1 + $0x268] sm:$0xf]
  %v178 = vld [vmem:[%s1 + $0x26c] sm:$0xf]
  %v179 = vld [vmem:[%s1 + $0x270] sm:$0xf]
  %v180 = vld [vmem:[%s1 + $0x274] sm:$0xf]
  %v181 = vld [vmem:[%s1 + $0x278] sm:$0xf]
  %v182 = vld [vmem:[%s1 + $0x27c] sm:$0xf]
  %v183 = vld [vmem:[%s1 + $0x280] sm:$0xf]
  %v184 = vld [vmem:[%s1 + $0x284] sm:$0xf]
  %v185 = vld [vmem:[%s1 + $0x288] sm:$0xf]
  %v186 = vld [vmem:[%s1 + $0x28c] sm:$0xf]
  %v187 = vld [vmem:[%s1 + $0x290] sm:$0xf]
  %v188 = vld [vmem:[%s1 + $0x294] sm:$0xf]
  %v189 = vld [vmem:[%s1 + $0x298] sm:$0xf]
  %v190 = vld [vmem:[%s1 + $0x29c] sm:$0xf]
  %v191 = vld [vmem:[%s1 + $0x2a0] sm:$0xf]
  %v192 = vld [vmem:[%s1 + $0x2a4] sm:$0xf]
  %v193 = vld [vmem:[%s1 + $0x2a8] sm:$0xf]
  %v194 = vld [vmem:[%s1 + $0x2ac] sm:$0xf]
  %v195 = vld [vmem:[%s1 + $0x2b0] sm:$0xf]
  %v196 = vld [vmem:[%s1 + $0x2b4] sm:$0xf]
  %v197 = vld [vmem:[%s1 + $0x2b8] sm:$0xf]
  %v198 = vld [vmem:[%s1 + $0x2bc] sm:$0xf]
  %v199 = vld [vmem:[%s1 + $0x2c0] sm:$0xf]
  %v200 = vld [vmem:[%s1 + $0x2c4] sm:$0xf]
  %v201 = vld [vmem:[%s1 + $0x2c8] sm:$0xf]
  %v202 = vld [vmem:[%s1 + $0x2cc] sm:$0xf]
  %v203 = vld [vmem:[%s1 + $0x2d0] sm:$0xf]
  %v204 = vld [vmem:[%s1 + $0x2d4] sm:$0xf]
  %v205 = vld [vmem:[%s1 + $0x2d8] sm:$0xf]
  %v206 = vld [vmem:[%s1 + $0x2dc] sm:$0xf]
  %v207 = vld [vmem:[%s1 + $0x2e0] sm:$0xf]
  %v208 = vld [vmem:[%s1 + $0x2e4] sm:$0xf]
  %v209 = vld [vmem:[%s1 + $0x2e8] sm:$0xf]
  %v210 = vld [vmem:[%s1 + $0x2ec] sm:$0xf]
  %v211 = vld [vmem:[%s1 + $0x2f0] sm:$0xf]
  %v212 = vld [vmem:[%s1 + $0x2f4] sm:$0xf]
  %v213 = vld [vmem:[%s1 + $0x2f8] sm:$0xf]
  %v214 = vld [vmem:[%s1 + $0x2fc] sm:$0xf]
  %v215 = vld [vmem:[%s1 + $0x300] sm:$0xf]
  %v216 = vld [vmem:[%s1 + $0x304] sm:$0xf]
  %v217 = vld [vmem:[%s1 + $0x308] sm:$0xf]
  %v218 = vld [vmem:[%s1 + $0x30c] sm:$0xf]
  %v219 = vld [vmem:[%s1 + $0x310] sm:$0xf]
  %v220 = vld [vmem:[%s1 + $0x314] sm:$0xf]
  %v221 = vld [vmem:[%s1 + $0x318] sm:$0xf]
  %v222 = vld [vmem:[%s1 + $0x31c] sm:$0xf]
  %v223 = vld [vmem:[%s1 + $0x320] sm:$0xf]
  %v224 = vld [vmem:[%s1 + $0x324] sm:$0xf]
  %v225 = vld [vmem:[%s1 + $0x328] sm:$0xf]
  %v226 = vld [vmem:[%s1 + $0x32c] sm:$0xf]
  %v227 = vld [vmem:[%s1 + $0x330] sm:$0xf]
  %v228 = vld [vmem:[%s1 + $0x334] sm:$0xf]
  %v229 = vld [vmem:[%s1 + $0x338] sm:$0xf]
  %v230 = vld [vmem:[%s1 + $0x33c] sm:$0xf]
  %v231 = vld [vmem:[%s1 + $0x340] sm:$0xf]
  %v232 = vld [vmem:[%s1 + $0x344] sm:$0xf]
  %v233 = vld [vmem:[%s1 + $0x348] sm:$0xf]
  %v234 = vld [vmem:[%s1 + $0x34c] sm:$0xf]
  %v235 = vld [vmem:[%s1 + $0x350] sm:$0xf]
  %v236 = vld [vmem:[%s1 + $0x354] sm:$0xf]
  %v237 = vld [vmem:[%s1 + $0x358] sm:$0xf]
  %v238 = vld [vmem:[%s1 + $0x35c] sm:$0xf]
  %v239 = vld [vmem:[%s1 + $0x360] sm:$0xf]
  %v240 = vld [vmem:[%s1 + $0x364] sm:$0xf]
  %v241 = vld [vmem:[%s1 + $0x368] sm:$0xf]
  %v242 = vld [vmem:[%s1 + $0x36c] sm:$0xf]
  %v243 = vld [vmem:[%s1 + $0x370] sm:$0xf]
  %v244 = vld [vmem:[%s1 + $0x374] sm:$0xf]
  %v245 = vld [vmem:[%s1 + $0x378] sm:$0xf]
  %v246 = vld [vmem:[%s1 + $0x37c] sm:$0xf]
  %v247 = vld [vmem:[%s1 + $0x380] sm:$0xf]
  %v248 = vld [vmem:[%s1 + $0x384] sm:$0xf]
  %v249 = vld [vmem:[%s1 + $0x388] sm:$0xf]
  %v250 = vld [vmem:[%s1 + $0x38c] sm:$0xf]
  %v251 = vld [vmem:[%s1 + $0x390] sm:$0xf]
  %v252 = vld [vmem:[%s1 + $0x394] sm:$0xf]
  %v253 = vld [vmem:[%s1 + $0x398] sm:$0xf]
  %v254 = vld [vmem:[%s1 + $0x39c] sm:$0xf]
  %v255 = vld [vmem:[%s1 + $0x3a0] sm:$0xf]
  %v256 = vld [vmem:[%s1 + $0x3a4] sm:$0xf]
  %v257 = vld [vmem:[%s1 + $0x3a8] sm:$0xf]
  %v258 = vld [vmem:[%s1 + $0x3ac] sm:$0xf]
  %v259 = vld [vmem:[%s1 + $0x3b0] sm:$0xf]
  %v260 = vld [vmem:[%s1 + $0x3b4] sm:$0xf]
  %v261 = vld [vmem:[%s1 + $0x3b8] sm:$0xf]
  %v262 = vld [vmem:[%s1 + $0x3bc] sm:$0xf]
  %v263 = vld [vmem:[%s1 + $0x3c0] sm:$0xf]
  %v264 = vld [vmem:[%s1 + $0x3c4] sm:$0xf]
  %v265 = vld [vmem:[%s1 + $0x3c8] sm:$0xf]
  %v266 = vld [vmem:[%s1 + $0x3cc] sm:$0xf]
  %v267 = vld [vmem:[%s1 + $0x3d0] sm:$0xf]
  %v268 = vld [vmem:[%s1 + $0x3d4] sm:$0xf]
  %v269 = vld [vmem:[%s1 + $0x3d8] sm:$0xf]
  %v270 = vld [vmem:[%s1 + $0x3dc] sm:$0xf]
  %v271 = vld [vmem:[%s1 + $0x3e0] sm:$0xf]
  %v272 = vld [vmem:[%s1 + $0x3e4] sm:$0xf]
  %v273 = vld [vmem:[%s1 + $0x3e8] sm:$0xf]
  %v274 = vld [vmem:[%s1 + $0x3ec] sm:$0xf]
  %v275 = vld [vmem:[%s1 + $0x3f0] sm:$0xf]
  %v276 = vld [vmem:[%s1 + $0x3f4] sm:$0xf]
  %v277 = vld [vmem:[%s1 + $0x3f8] sm:$0xf]
  %v278 = vld [vmem:[%s1 + $0x3fc] sm:$0xf]
  %v279 = vld [vmem:[%s2] sm:$0x1]
  %v281 = vlaneseq
  %v282 = vshrl.u32 %v281, 7
  %v283 = vsub.s32 0, %v282
  %v284 = vrot.slane %v279, %v283
  %v294 = vunpack.c.l.b16 %v15
  %v295 = vunpack.c.h.b16 %v15
  %v296 = vunpack.c.l.b16 %v16
  %v297 = vunpack.c.h.b16 %v16
  %v298 = vunpack.c.l.b16 %v17
  %v299 = vunpack.c.h.b16 %v17
  %v300 = vunpack.c.l.b16 %v18
  %v301 = vunpack.c.h.b16 %v18
  %v302 = vunpack.c.l.b16 %v19
  %v303 = vunpack.c.h.b16 %v19
  %v304 = vunpack.c.l.b16 %v20
  %v305 = vunpack.c.h.b16 %v20
  %v306 = vunpack.c.l.b16 %v21
  %v307 = vunpack.c.h.b16 %v21
  %v308 = vunpack.c.l.b16 %v22
  %v309 = vunpack.c.h.b16 %v22
  %v310 = vpack.c.b16 %v294, %v294
  %v311 = vpack.c.b16 %v295, %v295
  %v312 = vpack.c.b16 %v296, %v296
  %v313 = vpack.c.b16 %v297, %v297
  %v314 = vpack.c.b16 %v298, %v298
  %v315 = vpack.c.b16 %v299, %v299
  %v316 = vpack.c.b16 %v300, %v300
  %v317 = vpack.c.b16 %v301, %v301
  %v318 = vpack.c.b16 %v302, %v302
  %v319 = vpack.c.b16 %v303, %v303
  %v320 = vpack.c.b16 %v304, %v304
  %v321 = vpack.c.b16 %v305, %v305
  %v322 = vpack.c.b16 %v306, %v306
  %v323 = vpack.c.b16 %v307, %v307
  %v324 = vpack.c.b16 %v308, %v308
  %v325 = vpack.c.b16 %v309, %v309
  %v598 = vunpack.c.l.b16 %v23
  %v599 = vunpack.c.l.b16 %v24
  %v600 = vunpack.c.l.b16 %v25
  %v601 = vunpack.c.l.b16 %v26
  %v602 = vunpack.c.l.b16 %v27
  %v603 = vunpack.c.l.b16 %v28
  %v604 = vunpack.c.l.b16 %v29
  %v605 = vunpack.c.l.b16 %v30
  %v606 = vunpack.c.l.b16 %v31
  %v607 = vunpack.c.l.b16 %v32
  %v608 = vunpack.c.l.b16 %v33
  %v609 = vunpack.c.l.b16 %v34
  %v610 = vunpack.c.l.b16 %v35
  %v611 = vunpack.c.l.b16 %v36
  %v612 = vunpack.c.l.b16 %v37
  %v613 = vunpack.c.l.b16 %v38
  %v614 = vunpack.c.l.b16 %v39
  %v615 = vunpack.c.l.b16 %v40
  %v616 = vunpack.c.l.b16 %v41
  %v617 = vunpack.c.l.b16 %v42
  %v618 = vunpack.c.l.b16 %v43
  %v619 = vunpack.c.l.b16 %v44
  %v620 = vunpack.c.l.b16 %v45
  %v621 = vunpack.c.l.b16 %v46
  %v622 = vunpack.c.l.b16 %v47
  %v623 = vunpack.c.l.b16 %v48
  %v624 = vunpack.c.l.b16 %v49
  %v625 = vunpack.c.l.b16 %v50
  %v626 = vunpack.c.l.b16 %v51
  %v627 = vunpack.c.l.b16 %v52
  %v628 = vunpack.c.l.b16 %v53
  %v629 = vunpack.c.l.b16 %v54
  %v630 = vunpack.c.l.b16 %v55
  %v631 = vunpack.c.l.b16 %v56
  %v632 = vunpack.c.l.b16 %v57
  %v633 = vunpack.c.l.b16 %v58
  %v634 = vunpack.c.l.b16 %v59
  %v635 = vunpack.c.l.b16 %v60
  %v636 = vunpack.c.l.b16 %v61
  %v637 = vunpack.c.l.b16 %v62
  %v638 = vunpack.c.l.b16 %v63
  %v639 = vunpack.c.l.b16 %v64
  %v640 = vunpack.c.l.b16 %v65
  %v641 = vunpack.c.l.b16 %v66
  %v642 = vunpack.c.l.b16 %v67
  %v643 = vunpack.c.l.b16 %v68
  %v644 = vunpack.c.l.b16 %v69
  %v645 = vunpack.c.l.b16 %v70
  %v646 = vunpack.c.l.b16 %v71
  %v647 = vunpack.c.l.b16 %v72
  %v648 = vunpack.c.l.b16 %v73
  %v649 = vunpack.c.l.b16 %v74
  %v650 = vunpack.c.l.b16 %v75
  %v651 = vunpack.c.l.b16 %v76
  %v652 = vunpack.c.l.b16 %v77
  %v653 = vunpack.c.l.b16 %v78
  %v654 = vunpack.c.l.b16 %v79
  %v655 = vunpack.c.l.b16 %v80
  %v656 = vunpack.c.l.b16 %v81
  %v657 = vunpack.c.l.b16 %v82
  %v658 = vunpack.c.l.b16 %v83
  %v659 = vunpack.c.l.b16 %v84
  %v660 = vunpack.c.l.b16 %v85
  %v661 = vunpack.c.l.b16 %v86
  %v662 = vunpack.c.l.b16 %v87
  %v663 = vunpack.c.l.b16 %v88
  %v664 = vunpack.c.l.b16 %v89
  %v665 = vunpack.c.l.b16 %v90
  %v666 = vunpack.c.l.b16 %v91
  %v667 = vunpack.c.l.b16 %v92
  %v668 = vunpack.c.l.b16 %v93
  %v669 = vunpack.c.l.b16 %v94
  %v670 = vunpack.c.l.b16 %v95
  %v671 = vunpack.c.l.b16 %v96
  %v672 = vunpack.c.l.b16 %v97
  %v673 = vunpack.c.l.b16 %v98
  %v674 = vunpack.c.l.b16 %v99
  %v675 = vunpack.c.l.b16 %v100
  %v676 = vunpack.c.l.b16 %v101
  %v677 = vunpack.c.l.b16 %v102
  %v678 = vunpack.c.l.b16 %v103
  %v679 = vunpack.c.l.b16 %v104
  %v680 = vunpack.c.l.b16 %v105
  %v681 = vunpack.c.l.b16 %v106
  %v682 = vunpack.c.l.b16 %v107
  %v683 = vunpack.c.l.b16 %v108
  %v684 = vunpack.c.l.b16 %v109
  %v685 = vunpack.c.l.b16 %v110
  %v686 = vunpack.c.l.b16 %v111
  %v687 = vunpack.c.l.b16 %v112
  %v688 = vunpack.c.l.b16 %v113
  %v689 = vunpack.c.l.b16 %v114
  %v690 = vunpack.c.l.b16 %v115
  %v691 = vunpack.c.l.b16 %v116
  %v692 = vunpack.c.l.b16 %v117
  %v693 = vunpack.c.l.b16 %v118
  %v694 = vunpack.c.l.b16 %v119
  %v695 = vunpack.c.l.b16 %v120
  %v696 = vunpack.c.l.b16 %v121
  %v697 = vunpack.c.l.b16 %v122
  %v698 = vunpack.c.l.b16 %v123
  %v699 = vunpack.c.l.b16 %v124
  %v700 = vunpack.c.l.b16 %v125
  %v701 = vunpack.c.l.b16 %v126
  %v702 = vunpack.c.l.b16 %v127
  %v703 = vunpack.c.l.b16 %v128
  %v704 = vunpack.c.l.b16 %v129
  %v705 = vunpack.c.l.b16 %v130
  %v706 = vunpack.c.l.b16 %v131
  %v707 = vunpack.c.l.b16 %v132
  %v708 = vunpack.c.l.b16 %v133
  %v709 = vunpack.c.l.b16 %v134
  %v710 = vunpack.c.l.b16 %v135
  %v711 = vunpack.c.l.b16 %v136
  %v712 = vunpack.c.l.b16 %v137
  %v713 = vunpack.c.l.b16 %v138
  %v714 = vunpack.c.l.b16 %v139
  %v715 = vunpack.c.l.b16 %v140
  %v716 = vunpack.c.l.b16 %v141
  %v717 = vunpack.c.l.b16 %v142
  %v718 = vunpack.c.l.b16 %v143
  %v719 = vunpack.c.l.b16 %v144
  %v720 = vunpack.c.l.b16 %v145
  %v721 = vunpack.c.l.b16 %v146
  %v722 = vunpack.c.l.b16 %v147
  %v723 = vunpack.c.l.b16 %v148
  %v724 = vunpack.c.l.b16 %v149
  %v725 = vunpack.c.l.b16 %v150
  %v726 = vunpack.c.l.b16 %v151
  %v727 = vunpack.c.l.b16 %v152
  %v728 = vunpack.c.l.b16 %v153
  %v729 = vunpack.c.l.b16 %v154
  %v730 = vunpack.c.l.b16 %v155
  %v731 = vunpack.c.l.b16 %v156
  %v732 = vunpack.c.l.b16 %v157
  %v733 = vunpack.c.l.b16 %v158
  %v734 = vunpack.c.l.b16 %v159
  %v735 = vunpack.c.l.b16 %v160
  %v736 = vunpack.c.l.b16 %v161
  %v737 = vunpack.c.l.b16 %v162
  %v738 = vunpack.c.l.b16 %v163
  %v739 = vunpack.c.l.b16 %v164
  %v740 = vunpack.c.l.b16 %v165
  %v741 = vunpack.c.l.b16 %v166
  %v742 = vunpack.c.l.b16 %v167
  %v743 = vunpack.c.l.b16 %v168
  %v744 = vunpack.c.l.b16 %v169
  %v745 = vunpack.c.l.b16 %v170
  %v746 = vunpack.c.l.b16 %v171
  %v747 = vunpack.c.l.b16 %v172
  %v748 = vunpack.c.l.b16 %v173
  %v749 = vunpack.c.l.b16 %v174
  %v750 = vunpack.c.l.b16 %v175
  %v751 = vunpack.c.l.b16 %v176
  %v752 = vunpack.c.l.b16 %v177
  %v753 = vunpack.c.l.b16 %v178
  %v754 = vunpack.c.l.b16 %v179
  %v755 = vunpack.c.l.b16 %v180
  %v756 = vunpack.c.l.b16 %v181
  %v757 = vunpack.c.l.b16 %v182
  %v758 = vunpack.c.l.b16 %v183
  %v759 = vunpack.c.l.b16 %v184
  %v760 = vunpack.c.l.b16 %v185
  %v761 = vunpack.c.l.b16 %v186
  %v762 = vunpack.c.l.b16 %v187
  %v763 = vunpack.c.l.b16 %v188
  %v764 = vunpack.c.l.b16 %v189
  %v765 = vunpack.c.l.b16 %v190
  %v766 = vunpack.c.l.b16 %v191
  %v767 = vunpack.c.l.b16 %v192
  %v768 = vunpack.c.l.b16 %v193
  %v769 = vunpack.c.l.b16 %v194
  %v770 = vunpack.c.l.b16 %v195
  %v771 = vunpack.c.l.b16 %v196
  %v772 = vunpack.c.l.b16 %v197
  %v773 = vunpack.c.l.b16 %v198
  %v774 = vunpack.c.l.b16 %v199
  %v775 = vunpack.c.l.b16 %v200
  %v776 = vunpack.c.l.b16 %v201
  %v777 = vunpack.c.l.b16 %v202
  %v778 = vunpack.c.l.b16 %v203
  %v779 = vunpack.c.l.b16 %v204
  %v780 = vunpack.c.l.b16 %v205
  %v781 = vunpack.c.l.b16 %v206
  %v782 = vunpack.c.l.b16 %v207
  %v783 = vunpack.c.l.b16 %v208
  %v784 = vunpack.c.l.b16 %v209
  %v785 = vunpack.c.l.b16 %v210
  %v786 = vunpack.c.l.b16 %v211
  %v787 = vunpack.c.l.b16 %v212
  %v788 = vunpack.c.l.b16 %v213
  %v789 = vunpack.c.l.b16 %v214
  %v790 = vunpack.c.l.b16 %v215
  %v791 = vunpack.c.l.b16 %v216
  %v792 = vunpack.c.l.b16 %v217
  %v793 = vunpack.c.l.b16 %v218
  %v794 = vunpack.c.l.b16 %v219
  %v795 = vunpack.c.l.b16 %v220
  %v796 = vunpack.c.l.b16 %v221
  %v797 = vunpack.c.l.b16 %v222
  %v798 = vunpack.c.l.b16 %v223
  %v799 = vunpack.c.l.b16 %v224
  %v800 = vunpack.c.l.b16 %v225
  %v801 = vunpack.c.l.b16 %v226
  %v802 = vunpack.c.l.b16 %v227
  %v803 = vunpack.c.l.b16 %v228
  %v804 = vunpack.c.l.b16 %v229
  %v805 = vunpack.c.l.b16 %v230
  %v806 = vunpack.c.l.b16 %v231
  %v807 = vunpack.c.l.b16 %v232
  %v808 = vunpack.c.l.b16 %v233
  %v809 = vunpack.c.l.b16 %v234
  %v810 = vunpack.c.l.b16 %v235
  %v811 = vunpack.c.l.b16 %v236
  %v812 = vunpack.c.l.b16 %v237
  %v813 = vunpack.c.l.b16 %v238
  %v814 = vunpack.c.l.b16 %v239
  %v815 = vunpack.c.l.b16 %v240
  %v816 = vunpack.c.l.b16 %v241
  %v817 = vunpack.c.l.b16 %v242
  %v818 = vunpack.c.l.b16 %v243
  %v819 = vunpack.c.l.b16 %v244
  %v820 = vunpack.c.l.b16 %v245
  %v821 = vunpack.c.l.b16 %v246
  %v822 = vunpack.c.l.b16 %v247
  %v823 = vunpack.c.l.b16 %v248
  %v824 = vunpack.c.l.b16 %v249
  %v825 = vunpack.c.l.b16 %v250
  %v826 = vunpack.c.l.b16 %v251
  %v827 = vunpack.c.l.b16 %v252
  %v828 = vunpack.c.l.b16 %v253
  %v829 = vunpack.c.l.b16 %v254
  %v830 = vunpack.c.l.b16 %v255
  %v831 = vunpack.c.l.b16 %v256
  %v832 = vunpack.c.l.b16 %v257
  %v833 = vunpack.c.l.b16 %v258
  %v834 = vunpack.c.l.b16 %v259
  %v835 = vunpack.c.l.b16 %v260
  %v836 = vunpack.c.l.b16 %v261
  %v837 = vunpack.c.l.b16 %v262
  %v838 = vunpack.c.l.b16 %v263
  %v839 = vunpack.c.l.b16 %v264
  %v840 = vunpack.c.l.b16 %v265
  %v841 = vunpack.c.l.b16 %v266
  %v842 = vunpack.c.l.b16 %v267
  %v843 = vunpack.c.l.b16 %v268
  %v844 = vunpack.c.l.b16 %v269
  %v845 = vunpack.c.l.b16 %v270
  %v846 = vunpack.c.l.b16 %v271
  %v847 = vunpack.c.l.b16 %v272
  %v848 = vunpack.c.l.b16 %v273
  %v849 = vunpack.c.l.b16 %v274
  %v850 = vunpack.c.l.b16 %v275
  %v851 = vunpack.c.l.b16 %v276
  %v852 = vunpack.c.l.b16 %v277
  %v853 = vunpack.c.l.b16 %v278
  %v854 = vpack.c.b16 %v599, %v598
  %v855 = vpack.c.b16 %v601, %v600
  %v856 = vpack.c.b16 %v603, %v602
  %v857 = vpack.c.b16 %v605, %v604
  %v858 = vpack.c.b16 %v607, %v606
  %v859 = vpack.c.b16 %v609, %v608
  %v860 = vpack.c.b16 %v611, %v610
  %v861 = vpack.c.b16 %v613, %v612
  %v862 = vpack.c.b16 %v615, %v614
  %v863 = vpack.c.b16 %v617, %v616
  %v864 = vpack.c.b16 %v619, %v618
  %v865 = vpack.c.b16 %v621, %v620
  %v866 = vpack.c.b16 %v623, %v622
  %v867 = vpack.c.b16 %v625, %v624
  %v868 = vpack.c.b16 %v627, %v626
  %v869 = vpack.c.b16 %v629, %v628
  %v870 = vpack.c.b16 %v631, %v630
  %v871 = vpack.c.b16 %v633, %v632
  %v872 = vpack.c.b16 %v635, %v634
  %v873 = vpack.c.b16 %v637, %v636
  %v874 = vpack.c.b16 %v639, %v638
  %v875 = vpack.c.b16 %v641, %v640
  %v876 = vpack.c.b16 %v643, %v642
  %v877 = vpack.c.b16 %v645, %v644
  %v878 = vpack.c.b16 %v647, %v646
  %v879 = vpack.c.b16 %v649, %v648
  %v880 = vpack.c.b16 %v651, %v650
  %v881 = vpack.c.b16 %v653, %v652
  %v882 = vpack.c.b16 %v655, %v654
  %v883 = vpack.c.b16 %v657, %v656
  %v884 = vpack.c.b16 %v659, %v658
  %v885 = vpack.c.b16 %v661, %v660
  %v886 = vpack.c.b16 %v663, %v662
  %v887 = vpack.c.b16 %v665, %v664
  %v888 = vpack.c.b16 %v667, %v666
  %v889 = vpack.c.b16 %v669, %v668
  %v890 = vpack.c.b16 %v671, %v670
  %v891 = vpack.c.b16 %v673, %v672
  %v892 = vpack.c.b16 %v675, %v674
  %v893 = vpack.c.b16 %v677, %v676
  %v894 = vpack.c.b16 %v679, %v678
  %v895 = vpack.c.b16 %v681, %v680
  %v896 = vpack.c.b16 %v683, %v682
  %v897 = vpack.c.b16 %v685, %v684
  %v898 = vpack.c.b16 %v687, %v686
  %v899 = vpack.c.b16 %v689, %v688
  %v900 = vpack.c.b16 %v691, %v690
  %v901 = vpack.c.b16 %v693, %v692
  %v902 = vpack.c.b16 %v695, %v694
  %v903 = vpack.c.b16 %v697, %v696
  %v904 = vpack.c.b16 %v699, %v698
  %v905 = vpack.c.b16 %v701, %v700
  %v906 = vpack.c.b16 %v703, %v702
  %v907 = vpack.c.b16 %v705, %v704
  %v908 = vpack.c.b16 %v707, %v706
  %v909 = vpack.c.b16 %v709, %v708
  %v910 = vpack.c.b16 %v711, %v710
  %v911 = vpack.c.b16 %v713, %v712
  %v912 = vpack.c.b16 %v715, %v714
  %v913 = vpack.c.b16 %v717, %v716
  %v914 = vpack.c.b16 %v719, %v718
  %v915 = vpack.c.b16 %v721, %v720
  %v916 = vpack.c.b16 %v723, %v722
  %v917 = vpack.c.b16 %v725, %v724
  %v918 = vpack.c.b16 %v727, %v726
  %v919 = vpack.c.b16 %v729, %v728
  %v920 = vpack.c.b16 %v731, %v730
  %v921 = vpack.c.b16 %v733, %v732
  %v922 = vpack.c.b16 %v735, %v734
  %v923 = vpack.c.b16 %v737, %v736
  %v924 = vpack.c.b16 %v739, %v738
  %v925 = vpack.c.b16 %v741, %v740
  %v926 = vpack.c.b16 %v743, %v742
  %v927 = vpack.c.b16 %v745, %v744
  %v928 = vpack.c.b16 %v747, %v746
  %v929 = vpack.c.b16 %v749, %v748
  %v930 = vpack.c.b16 %v751, %v750
  %v931 = vpack.c.b16 %v753, %v752
  %v932 = vpack.c.b16 %v755, %v754
  %v933 = vpack.c.b16 %v757, %v756
  %v934 = vpack.c.b16 %v759, %v758
  %v935 = vpack.c.b16 %v761, %v760
  %v936 = vpack.c.b16 %v763, %v762
  %v937 = vpack.c.b16 %v765, %v764
  %v938 = vpack.c.b16 %v767, %v766
  %v939 = vpack.c.b16 %v769, %v768
  %v940 = vpack.c.b16 %v771, %v770
  %v941 = vpack.c.b16 %v773, %v772
  %v942 = vpack.c.b16 %v775, %v774
  %v943 = vpack.c.b16 %v777, %v776
  %v944 = vpack.c.b16 %v779, %v778
  %v945 = vpack.c.b16 %v781, %v780
  %v946 = vpack.c.b16 %v783, %v782
  %v947 = vpack.c.b16 %v785, %v784
  %v948 = vpack.c.b16 %v787, %v786
  %v949 = vpack.c.b16 %v789, %v788
  %v950 = vpack.c.b16 %v791, %v790
  %v951 = vpack.c.b16 %v793, %v792
  %v952 = vpack.c.b16 %v795, %v794
  %v953 = vpack.c.b16 %v797, %v796
  %v954 = vpack.c.b16 %v799, %v798
  %v955 = vpack.c.b16 %v801, %v800
  %v956 = vpack.c.b16 %v803, %v802
  %v957 = vpack.c.b16 %v805, %v804
  %v958 = vpack.c.b16 %v807, %v806
  %v959 = vpack.c.b16 %v809, %v808
  %v960 = vpack.c.b16 %v811, %v810
  %v961 = vpack.c.b16 %v813, %v812
  %v962 = vpack.c.b16 %v815, %v814
  %v963 = vpack.c.b16 %v817, %v816
  %v964 = vpack.c.b16 %v819, %v818
  %v965 = vpack.c.b16 %v821, %v820
  %v966 = vpack.c.b16 %v823, %v822
  %v967 = vpack.c.b16 %v825, %v824
  %v968 = vpack.c.b16 %v827, %v826
  %v969 = vpack.c.b16 %v829, %v828
  %v970 = vpack.c.b16 %v831, %v830
  %v971 = vpack.c.b16 %v833, %v832
  %v972 = vpack.c.b16 %v835, %v834
  %v973 = vpack.c.b16 %v837, %v836
  %v974 = vpack.c.b16 %v839, %v838
  %v975 = vpack.c.b16 %v841, %v840
  %v976 = vpack.c.b16 %v843, %v842
  %v977 = vpack.c.b16 %v845, %v844
  %v978 = vpack.c.b16 %v847, %v846
  %v979 = vpack.c.b16 %v849, %v848
  %v980 = vpack.c.b16 %v851, %v850
  %v981 = vpack.c.b16 %v853, %v852
  %1110 = vmatprep.subr.bf16.mxu0 0
  %1111 = vmatpush1.bf16.msra.mxu0 %v854
  %1112 = vmatprep.subr.bf16.mxu0 0
  %1113 = vmatpush1.bf16.msra.mxu0 %v855
  %1114 = vmatprep.subr.bf16.mxu0 0
  %1115 = vmatpush1.bf16.msra.mxu0 %v856
  %1116 = vmatprep.subr.bf16.mxu0 0
  %1117 = vmatpush1.bf16.msra.mxu0 %v857
  %1118 = vmatprep.subr.bf16.mxu0 0
  %1119 = vmatpush1.bf16.msra.mxu0 %v858
  %1120 = vmatprep.subr.bf16.mxu0 0
  %1121 = vmatpush1.bf16.msra.mxu0 %v859
  %1122 = vmatprep.subr.bf16.mxu0 0
  %1123 = vmatpush1.bf16.msra.mxu0 %v860
  %1124 = vmatprep.subr.bf16.mxu0 0
  %1125 = vmatpush1.bf16.msra.mxu0 %v861
  %1126 = vmatprep.subr.bf16.mxu0 0
  %1127 = vmatpush1.bf16.msra.mxu0 %v862
  %1128 = vmatprep.subr.bf16.mxu0 0
  %1129 = vmatpush1.bf16.msra.mxu0 %v863
  %1130 = vmatprep.subr.bf16.mxu0 0
  %1131 = vmatpush1.bf16.msra.mxu0 %v864
  %1132 = vmatprep.subr.bf16.mxu0 0
  %1133 = vmatpush1.bf16.msra.mxu0 %v865
  %1134 = vmatprep.subr.bf16.mxu0 0
  %1135 = vmatpush1.bf16.msra.mxu0 %v866
  %1136 = vmatprep.subr.bf16.mxu0 0
  %1137 = vmatpush1.bf16.msra.mxu0 %v867
  %1138 = vmatprep.subr.bf16.mxu0 0
  %1139 = vmatpush1.bf16.msra.mxu0 %v868
  %1140 = vmatprep.subr.bf16.mxu0 0
  %1141 = vmatpush1.bf16.msra.mxu0 %v869
  %1142 = vmatprep.mubr.bf16.mxu0 %v311
  %1143 = vmatmul.mubr.bf16.gmra.mrb[0].mxu0 %v310
  %v1144 = vpop.f32.mrb[0].mxu0
  %v1145 = vadd.f32 %v284, %v1144
  %v1146 = vpop.f32.mrb[0].mxu0
  %v1147 = vpop.f32.mrb[0].mxu0
  %v1148 = vpop.f32.mrb[0].mxu0
  %1149 = vdwg.mxu0
  %1150 = vmatprep.subr.bf16.mxu0 0
  %1151 = vmatpush1.bf16.msra.mxu0 %v870
  %1152 = vmatprep.subr.bf16.mxu0 0
  %1153 = vmatpush1.bf16.msra.mxu0 %v871
  %1154 = vmatprep.subr.bf16.mxu0 0
  %1155 = vmatpush1.bf16.msra.mxu0 %v872
  %1156 = vmatprep.subr.bf16.mxu0 0
  %1157 = vmatpush1.bf16.msra.mxu0 %v873
  %1158 = vmatprep.subr.bf16.mxu0 0
  %1159 = vmatpush1.bf16.msra.mxu0 %v874
  %1160 = vmatprep.subr.bf16.mxu0 0
  %1161 = vmatpush1.bf16.msra.mxu0 %v875
  %1162 = vmatprep.subr.bf16.mxu0 0
  %1163 = vmatpush1.bf16.msra.mxu0 %v876
  %1164 = vmatprep.subr.bf16.mxu0 0
  %1165 = vmatpush1.bf16.msra.mxu0 %v877
  %1166 = vmatprep.subr.bf16.mxu0 0
  %1167 = vmatpush1.bf16.msra.mxu0 %v878
  %1168 = vmatprep.subr.bf16.mxu0 0
  %1169 = vmatpush1.bf16.msra.mxu0 %v879
  %1170 = vmatprep.subr.bf16.mxu0 0
  %1171 = vmatpush1.bf16.msra.mxu0 %v880
  %1172 = vmatprep.subr.bf16.mxu0 0
  %1173 = vmatpush1.bf16.msra.mxu0 %v881
  %1174 = vmatprep.subr.bf16.mxu0 0
  %1175 = vmatpush1.bf16.msra.mxu0 %v882
  %1176 = vmatprep.subr.bf16.mxu0 0
  %1177 = vmatpush1.bf16.msra.mxu0 %v883
  %1178 = vmatprep.subr.bf16.mxu0 0
  %1179 = vmatpush1.bf16.msra.mxu0 %v884
  %1180 = vmatprep.subr.bf16.mxu0 0
  %1181 = vmatpush1.bf16.msra.mxu0 %v885
  %1182 = vmatprep.mubr.bf16.mxu0 %v313
  %1183 = vmatmul.mubr.bf16.gmra.mrb[0].mxu0 %v312
  %v1184 = vpop.f32.mrb[0].mxu0
  %v1185 = vadd.f32 %v1145, %v1184
  %v1186 = vpop.f32.mrb[0].mxu0
  %v1187 = vpop.f32.mrb[0].mxu0
  %v1188 = vpop.f32.mrb[0].mxu0
  %1189 = vdwg.mxu0
  %1190 = vmatprep.subr.bf16.mxu0 0
  %1191 = vmatpush1.bf16.msra.mxu0 %v886
  %1192 = vmatprep.subr.bf16.mxu0 0
  %1193 = vmatpush1.bf16.msra.mxu0 %v887
  %1194 = vmatprep.subr.bf16.mxu0 0
  %1195 = vmatpush1.bf16.msra.mxu0 %v888
  %1196 = vmatprep.subr.bf16.mxu0 0
  %1197 = vmatpush1.bf16.msra.mxu0 %v889
  %1198 = vmatprep.subr.bf16.mxu0 0
  %1199 = vmatpush1.bf16.msra.mxu0 %v890
  %1200 = vmatprep.subr.bf16.mxu0 0
  %1201 = vmatpush1.bf16.msra.mxu0 %v891
  %1202 = vmatprep.subr.bf16.mxu0 0
  %1203 = vmatpush1.bf16.msra.mxu0 %v892
  %1204 = vmatprep.subr.bf16.mxu0 0
  %1205 = vmatpush1.bf16.msra.mxu0 %v893
  %1206 = vmatprep.subr.bf16.mxu0 0
  %1207 = vmatpush1.bf16.msra.mxu0 %v894
  %1208 = vmatprep.subr.bf16.mxu0 0
  %1209 = vmatpush1.bf16.msra.mxu0 %v895
  %1210 = vmatprep.subr.bf16.mxu0 0
  %1211 = vmatpush1.bf16.msra.mxu0 %v896
  %1212 = vmatprep.subr.bf16.mxu0 0
  %1213 = vmatpush1.bf16.msra.mxu0 %v897
  %1214 = vmatprep.subr.bf16.mxu0 0
  %1215 = vmatpush1.bf16.msra.mxu0 %v898
  %1216 = vmatprep.subr.bf16.mxu0 0
  %1217 = vmatpush1.bf16.msra.mxu0 %v899
  %1218 = vmatprep.subr.bf16.mxu0 0
  %1219 = vmatpush1.bf16.msra.mxu0 %v900
  %1220 = vmatprep.subr.bf16.mxu0 0
  %1221 = vmatpush1.bf16.msra.mxu0 %v901
  %1222 = vmatprep.mubr.bf16.mxu0 %v315
  %1223 = vmatmul.mubr.bf16.gmra.mrb[0].mxu0 %v314
  %v1224 = vpop.f32.mrb[0].mxu0
  %v1225 = vadd.f32 %v1185, %v1224
  %v1226 = vpop.f32.mrb[0].mxu0
  %v1227 = vpop.f32.mrb[0].mxu0
  %v1228 = vpop.f32.mrb[0].mxu0
  %1229 = vdwg.mxu0
  %1230 = vmatprep.subr.bf16.mxu0 0
  %1231 = vmatpush1.bf16.msra.mxu0 %v902
  %1232 = vmatprep.subr.bf16.mxu0 0
  %1233 = vmatpush1.bf16.msra.mxu0 %v903
  %1234 = vmatprep.subr.bf16.mxu0 0
  %1235 = vmatpush1.bf16.msra.mxu0 %v904
  %1236 = vmatprep.subr.bf16.mxu0 0
  %1237 = vmatpush1.bf16.msra.mxu0 %v905
  %1238 = vmatprep.subr.bf16.mxu0 0
  %1239 = vmatpush1.bf16.msra.mxu0 %v906
  %1240 = vmatprep.subr.bf16.mxu0 0
  %1241 = vmatpush1.bf16.msra.mxu0 %v907
  %1242 = vmatprep.subr.bf16.mxu0 0
  %1243 = vmatpush1.bf16.msra.mxu0 %v908
  %1244 = vmatprep.subr.bf16.mxu0 0
  %1245 = vmatpush1.bf16.msra.mxu0 %v909
  %1246 = vmatprep.subr.bf16.mxu0 0
  %1247 = vmatpush1.bf16.msra.mxu0 %v910
  %1248 = vmatprep.subr.bf16.mxu0 0
  %1249 = vmatpush1.bf16.msra.mxu0 %v911
  %1250 = vmatprep.subr.bf16.mxu0 0
  %1251 = vmatpush1.bf16.msra.mxu0 %v912
  %1252 = vmatprep.subr.bf16.mxu0 0
  %1253 = vmatpush1.bf16.msra.mxu0 %v913
  %1254 = vmatprep.subr.bf16.mxu0 0
  %1255 = vmatpush1.bf16.msra.mxu0 %v914
  %1256 = vmatprep.subr.bf16.mxu0 0
  %1257 = vmatpush1.bf16.msra.mxu0 %v915
  %1258 = vmatprep.subr.bf16.mxu0 0
  %1259 = vmatpush1.bf16.msra.mxu0 %v916
  %1260 = vmatprep.subr.bf16.mxu0 0
  %1261 = vmatpush1.bf16.msra.mxu0 %v917
  %1262 = vmatprep.mubr.bf16.mxu0 %v317
  %1263 = vmatmul.mubr.bf16.gmra.mrb[0].mxu0 %v316
  %v1264 = vpop.f32.mrb[0].mxu0
  %v1265 = vadd.f32 %v1225, %v1264
  %v1266 = vpop.f32.mrb[0].mxu0
  %v1267 = vpop.f32.mrb[0].mxu0
  %v1268 = vpop.f32.mrb[0].mxu0
  %1269 = vdwg.mxu0
  %1270 = vmatprep.subr.bf16.mxu0 0
  %1271 = vmatpush1.bf16.msra.mxu0 %v918
  %1272 = vmatprep.subr.bf16.mxu0 0
  %1273 = vmatpush1.bf16.msra.mxu0 %v919
  %1274 = vmatprep.subr.bf16.mxu0 0
  %1275 = vmatpush1.bf16.msra.mxu0 %v920
  %1276 = vmatprep.subr.bf16.mxu0 0
  %1277 = vmatpush1.bf16.msra.mxu0 %v921
  %1278 = vmatprep.subr.bf16.mxu0 0
  %1279 = vmatpush1.bf16.msra.mxu0 %v922
  %1280 = vmatprep.subr.bf16.mxu0 0
  %1281 = vmatpush1.bf16.msra.mxu0 %v923
  %1282 = vmatprep.subr.bf16.mxu0 0
  %1283 = vmatpush1.bf16.msra.mxu0 %v924
  %1284 = vmatprep.subr.bf16.mxu0 0
  %1285 = vmatpush1.bf16.msra.mxu0 %v925
  %1286 = vmatprep.subr.bf16.mxu0 0
  %1287 = vmatpush1.bf16.msra.mxu0 %v926
  %1288 = vmatprep.subr.bf16.mxu0 0
  %1289 = vmatpush1.bf16.msra.mxu0 %v927
  %1290 = vmatprep.subr.bf16.mxu0 0
  %1291 = vmatpush1.bf16.msra.mxu0 %v928
  %1292 = vmatprep.subr.bf16.mxu0 0
  %1293 = vmatpush1.bf16.msra.mxu0 %v929
  %1294 = vmatprep.subr.bf16.mxu0 0
  %1295 = vmatpush1.bf16.msra.mxu0 %v930
  %1296 = vmatprep.subr.bf16.mxu0 0
  %1297 = vmatpush1.bf16.msra.mxu0 %v931
  %1298 = vmatprep.subr.bf16.mxu0 0
  %1299 = vmatpush1.bf16.msra.mxu0 %v932
  %1300 = vmatprep.subr.bf16.mxu0 0
  %1301 = vmatpush1.bf16.msra.mxu0 %v933
  %1302 = vmatprep.mubr.bf16.mxu0 %v319
  %1303 = vmatmul.mubr.bf16.gmra.mrb[0].mxu0 %v318
  %v1304 = vpop.f32.mrb[0].mxu0
  %v1305 = vadd.f32 %v1265, %v1304
  %v1306 = vpop.f32.mrb[0].mxu0
  %v1307 = vpop.f32.mrb[0].mxu0
  %v1308 = vpop.f32.mrb[0].mxu0
  %1309 = vdwg.mxu0
  %1310 = vmatprep.subr.bf16.mxu0 0
  %1311 = vmatpush1.bf16.msra.mxu0 %v934
  %1312 = vmatprep.subr.bf16.mxu0 0
  %1313 = vmatpush1.bf16.msra.mxu0 %v935
  %1314 = vmatprep.subr.bf16.mxu0 0
  %1315 = vmatpush1.bf16.msra.mxu0 %v936
  %1316 = vmatprep.subr.bf16.mxu0 0
  %1317 = vmatpush1.bf16.msra.mxu0 %v937
  %1318 = vmatprep.subr.bf16.mxu0 0
  %1319 = vmatpush1.bf16.msra.mxu0 %v938
  %1320 = vmatprep.subr.bf16.mxu0 0
  %1321 = vmatpush1.bf16.msra.mxu0 %v939
  %1322 = vmatprep.subr.bf16.mxu0 0
  %1323 = vmatpush1.bf16.msra.mxu0 %v940
  %1324 = vmatprep.subr.bf16.mxu0 0
  %1325 = vmatpush1.bf16.msra.mxu0 %v941
  %1326 = vmatprep.subr.bf16.mxu0 0
  %1327 = vmatpush1.bf16.msra.mxu0 %v942
  %1328 = vmatprep.subr.bf16.mxu0 0
  %1329 = vmatpush1.bf16.msra.mxu0 %v943
  %1330 = vmatprep.subr.bf16.mxu0 0
  %1331 = vmatpush1.bf16.msra.mxu0 %v944
  %1332 = vmatprep.subr.bf16.mxu0 0
  %1333 = vmatpush1.bf16.msra.mxu0 %v945
  %1334 = vmatprep.subr.bf16.mxu0 0
  %1335 = vmatpush1.bf16.msra.mxu0 %v946
  %1336 = vmatprep.subr.bf16.mxu0 0
  %1337 = vmatpush1.bf16.msra.mxu0 %v947
  %1338 = vmatprep.subr.bf16.mxu0 0
  %1339 = vmatpush1.bf16.msra.mxu0 %v948
  %1340 = vmatprep.subr.bf16.mxu0 0
  %1341 = vmatpush1.bf16.msra.mxu0 %v949
  %1342 = vmatprep.mubr.bf16.mxu0 %v321
  %1343 = vmatmul.mubr.bf16.gmra.mrb[0].mxu0 %v320
  %v1344 = vpop.f32.mrb[0].mxu0
  %v1345 = vadd.f32 %v1305, %v1344
  %v1346 = vpop.f32.mrb[0].mxu0
  %v1347 = vpop.f32.mrb[0].mxu0
  %v1348 = vpop.f32.mrb[0].mxu0
  %1349 = vdwg.mxu0
  %1350 = vmatprep.subr.bf16.mxu0 0
  %1351 = vmatpush1.bf16.msra.mxu0 %v950
  %1352 = vmatprep.subr.bf16.mxu0 0
  %1353 = vmatpush1.bf16.msra.mxu0 %v951
  %1354 = vmatprep.subr.bf16.mxu0 0
  %1355 = vmatpush1.bf16.msra.mxu0 %v952
  %1356 = vmatprep.subr.bf16.mxu0 0
  %1357 = vmatpush1.bf16.msra.mxu0 %v953
  %1358 = vmatprep.subr.bf16.mxu0 0
  %1359 = vmatpush1.bf16.msra.mxu0 %v954
  %1360 = vmatprep.subr.bf16.mxu0 0
  %1361 = vmatpush1.bf16.msra.mxu0 %v955
  %1362 = vmatprep.subr.bf16.mxu0 0
  %1363 = vmatpush1.bf16.msra.mxu0 %v956
  %1364 = vmatprep.subr.bf16.mxu0 0
  %1365 = vmatpush1.bf16.msra.mxu0 %v957
  %1366 = vmatprep.subr.bf16.mxu0 0
  %1367 = vmatpush1.bf16.msra.mxu0 %v958
  %1368 = vmatprep.subr.bf16.mxu0 0
  %1369 = vmatpush1.bf16.msra.mxu0 %v959
  %1370 = vmatprep.subr.bf16.mxu0 0
  %1371 = vmatpush1.bf16.msra.mxu0 %v960
  %1372 = vmatprep.subr.bf16.mxu0 0
  %1373 = vmatpush1.bf16.msra.mxu0 %v961
  %1374 = vmatprep.subr.bf16.mxu0 0
  %1375 = vmatpush1.bf16.msra.mxu0 %v962
  %1376 = vmatprep.subr.bf16.mxu0 0
  %1377 = vmatpush1.bf16.msra.mxu0 %v963
  %1378 = vmatprep.subr.bf16.mxu0 0
  %1379 = vmatpush1.bf16.msra.mxu0 %v964
  %1380 = vmatprep.subr.bf16.mxu0 0
  %1381 = vmatpush1.bf16.msra.mxu0 %v965
  %1382 = vmatprep.mubr.bf16.mxu0 %v323
  %1383 = vmatmul.mubr.bf16.gmra.mrb[0].mxu0 %v322
  %v1384 = vpop.f32.mrb[0].mxu0
  %v1385 = vadd.f32 %v1345, %v1384
  %v1386 = vpop.f32.mrb[0].mxu0
  %v1387 = vpop.f32.mrb[0].mxu0
  %v1388 = vpop.f32.mrb[0].mxu0
  %1389 = vdwg.mxu0
  %1390 = vmatprep.subr.bf16.mxu0 0
  %1391 = vmatpush1.bf16.msra.mxu0 %v966
  %1392 = vmatprep.subr.bf16.mxu0 0
  %1393 = vmatpush1.bf16.msra.mxu0 %v967
  %1394 = vmatprep.subr.bf16.mxu0 0
  %1395 = vmatpush1.bf16.msra.mxu0 %v968
  %1396 = vmatprep.subr.bf16.mxu0 0
  %1397 = vmatpush1.bf16.msra.mxu0 %v969
  %1398 = vmatprep.subr.bf16.mxu0 0
  %1399 = vmatpush1.bf16.msra.mxu0 %v970
  %1400 = vmatprep.subr.bf16.mxu0 0
  %1401 = vmatpush1.bf16.msra.mxu0 %v971
  %1402 = vmatprep.subr.bf16.mxu0 0
  %1403 = vmatpush1.bf16.msra.mxu0 %v972
  %1404 = vmatprep.subr.bf16.mxu0 0
  %1405 = vmatpush1.bf16.msra.mxu0 %v973
  %1406 = vmatprep.subr.bf16.mxu0 0
  %1407 = vmatpush1.bf16.msra.mxu0 %v974
  %1408 = vmatprep.subr.bf16.mxu0 0
  %1409 = vmatpush1.bf16.msra.mxu0 %v975
  %1410 = vmatprep.subr.bf16.mxu0 0
  %1411 = vmatpush1.bf16.msra.mxu0 %v976
  %1412 = vmatprep.subr.bf16.mxu0 0
  %1413 = vmatpush1.bf16.msra.mxu0 %v977
  %1414 = vmatprep.subr.bf16.mxu0 0
  %1415 = vmatpush1.bf16.msra.mxu0 %v978
  %1416 = vmatprep.subr.bf16.mxu0 0
  %1417 = vmatpush1.bf16.msra.mxu0 %v979
  %1418 = vmatprep.subr.bf16.mxu0 0
  %1419 = vmatpush1.bf16.msra.mxu0 %v980
  %1420 = vmatprep.subr.bf16.mxu0 0
  %1421 = vmatpush1.bf16.msra.mxu0 %v981
  %1422 = vmatprep.mubr.bf16.mxu0 %v325
  %1423 = vmatmul.mubr.bf16.gmra.mrb[0].mxu0 %v324
  %v1424 = vpop.f32.mrb[0].mxu0
  %v1425 = vadd.f32 %v1385, %v1424
  %v1426 = vpop.f32.mrb[0].mxu0
  %v1427 = vpop.f32.mrb[0].mxu0
  %v1428 = vpop.f32.mrb[0].mxu0
  %1429 = vdwg.mxu0
  %v1430 = vmax.f32 %v1425, 0.0
  %v1431 = vpack.c.bf16 %v1430, %v1430
  %1432 = vst [vmem:[%s3] sm:$0xf] %v1431
  // Predicated region
  $region14: #{dqn_forward.5} parent=0 // pred_check
    _
  $region15: #{dqn_forward.5} parent=0 // pred_check_branch
    %1434 = sbr.rel (0) target = $region17
  $region16: #{dqn_forward.5} parent=0 // pred_region
    _
  $region17: #{dqn_forward.5} parent=0 // pred_fallthru
    _
  // Predicated region
  $region18: #{dqn_forward.5} parent=0 // pred_check
    _
  $region19: #{dqn_forward.5} parent=0 // pred_check_branch
    %1436 = sbr.rel (0) target = $region21
  $region20: #{dqn_forward.5} parent=0 // pred_region
    _
  $region21: #{dqn_forward.5} parent=0 // pred_fallthru
    _

// kernel: dqn_forward.6
$region0: #{dqn_forward.6}
  #allocation0 [shape = 'u32[]', space=smem, size = 0x4, offset = 0x4, fixed_abs, tag = 'smem constant byte address 0x4 - core index']
  #allocation1 [shape = 'u32[144,128]{1,0:T(1,128)}', space=vmem, size = 0x12000, scoped, tag = 'internal scratch']
  %s0 = inlined_call_operand.vmem [shape: bf16[8,1152], index: 0, kind: input, shape index: {}]
  %s1 = inlined_call_operand.vmem [shape: bf16[1152,128], index: 1, kind: input, shape index: {}]
  %s2 = inlined_call_operand.vmem [shape: f32[1,128], index: 2, kind: input, shape index: {}]
  %s3 = inlined_call_operand.vmem [shape: bf16[8,128], index: 3, kind: output, shape index: {}]
  %s4 = sld [smem:[#allocation0]]
  $region22: #{dqn_forward.6} parent=0
    _
  %s6 = ssub.s32 1, %s4
  %s7 = scalar_select 0, %s6, %s4
  // Predicated region
  $region2: #{dqn_forward.6} parent=0 // pred_check
    _
  $region3: #{dqn_forward.6} parent=0 // pred_check_branch
    %9 = sbr.rel (0) target = $region5
  $region4: #{dqn_forward.6} parent=0 // pred_region
    _
  $region5: #{dqn_forward.6} parent=0 // pred_fallthru
    _
  // Predicated region
  $region6: #{dqn_forward.6} parent=0 // pred_check
    _
  $region7: #{dqn_forward.6} parent=0 // pred_check_branch
    %11 = sbr.rel (0) target = $region9
  $region8: #{dqn_forward.6} parent=0 // pred_region
    _
  $region9: #{dqn_forward.6} parent=0 // pred_fallthru
    _
  // Predicated region
  $region10: #{dqn_forward.6} parent=0 // pred_check
    _
  $region11: #{dqn_forward.6} parent=0 // pred_check_branch
    %13 = sbr.rel (0) target = $region13
  $region12: #{dqn_forward.6} parent=0 // pred_region
    _
  $region13: #{dqn_forward.6} parent=0 // pred_fallthru
    _
  %v15 = vld [vmem:[%s0] sm:$0xff]
  %v16 = vld [vmem:[%s0 + $0x8] sm:$0xff]
  %v17 = vld [vmem:[%s0 + $0x10] sm:$0xff]
  %v18 = vld [vmem:[%s0 + $0x18] sm:$0xff]
  %v19 = vld [vmem:[%s0 + $0x20] sm:$0xf]
  %v20 = vld [vmem:[%s1] sm:$0xf]
  %v21 = vld [vmem:[%s1 + $0x4] sm:$0xf]
  %v22 = vld [vmem:[%s1 + $0x8] sm:$0xf]
  %v23 = vld [vmem:[%s1 + $0xc] sm:$0xf]
  %v24 = vld [vmem:[%s1 + $0x10] sm:$0xf]
  %v25 = vld [vmem:[%s1 + $0x14] sm:$0xf]
  %v26 = vld [vmem:[%s1 + $0x18] sm:$0xf]
  %v27 = vld [vmem:[%s1 + $0x1c] sm:$0xf]
  %v28 = vld [vmem:[%s1 + $0x20] sm:$0xf]
  %v29 = vld [vmem:[%s1 + $0x24] sm:$0xf]
  %v30 = vld [vmem:[%s1 + $0x28] sm:$0xf]
  %v31 = vld [vmem:[%s1 + $0x2c] sm:$0xf]
  %v32 = vld [vmem:[%s1 + $0x30] sm:$0xf]
  %v33 = vld [vmem:[%s1 + $0x34] sm:$0xf]
  %v34 = vld [vmem:[%s1 + $0x38] sm:$0xf]
  %v35 = vld [vmem:[%s1 + $0x3c] sm:$0xf]
  %v36 = vld [vmem:[%s1 + $0x40] sm:$0xf]
  %v37 = vld [vmem:[%s1 + $0x44] sm:$0xf]
  %v38 = vld [vmem:[%s1 + $0x48] sm:$0xf]
  %v39 = vld [vmem:[%s1 + $0x4c] sm:$0xf]
  %v40 = vld [vmem:[%s1 + $0x50] sm:$0xf]
  %v41 = vld [vmem:[%s1 + $0x54] sm:$0xf]
  %v42 = vld [vmem:[%s1 + $0x58] sm:$0xf]
  %v43 = vld [vmem:[%s1 + $0x5c] sm:$0xf]
  %v44 = vld [vmem:[%s1 + $0x60] sm:$0xf]
  %v45 = vld [vmem:[%s1 + $0x64] sm:$0xf]
  %v46 = vld [vmem:[%s1 + $0x68] sm:$0xf]
  %v47 = vld [vmem:[%s1 + $0x6c] sm:$0xf]
  %v48 = vld [vmem:[%s1 + $0x70] sm:$0xf]
  %v49 = vld [vmem:[%s1 + $0x74] sm:$0xf]
  %v50 = vld [vmem:[%s1 + $0x78] sm:$0xf]
  %v51 = vld [vmem:[%s1 + $0x7c] sm:$0xf]
  %v52 = vld [vmem:[%s1 + $0x80] sm:$0xf]
  %v53 = vld [vmem:[%s1 + $0x84] sm:$0xf]
  %v54 = vld [vmem:[%s1 + $0x88] sm:$0xf]
  %v55 = vld [vmem:[%s1 + $0x8c] sm:$0xf]
  %v56 = vld [vmem:[%s1 + $0x90] sm:$0xf]
  %v57 = vld [vmem:[%s1 + $0x94] sm:$0xf]
  %v58 = vld [vmem:[%s1 + $0x98] sm:$0xf]
  %v59 = vld [vmem:[%s1 + $0x9c] sm:$0xf]
  %v60 = vld [vmem:[%s1 + $0xa0] sm:$0xf]
  %v61 = vld [vmem:[%s1 + $0xa4] sm:$0xf]
  %v62 = vld [vmem:[%s1 + $0xa8] sm:$0xf]
  %v63 = vld [vmem:[%s1 + $0xac] sm:$0xf]
  %v64 = vld [vmem:[%s1 + $0xb0] sm:$0xf]
  %v65 = vld [vmem:[%s1 + $0xb4] sm:$0xf]
  %v66 = vld [vmem:[%s1 + $0xb8] sm:$0xf]
  %v67 = vld [vmem:[%s1 + $0xbc] sm:$0xf]
  %v68 = vld [vmem:[%s1 + $0xc0] sm:$0xf]
  %v69 = vld [vmem:[%s1 + $0xc4] sm:$0xf]
  %v70 = vld [vmem:[%s1 + $0xc8] sm:$0xf]
  %v71 = vld [vmem:[%s1 + $0xcc] sm:$0xf]
  %v72 = vld [vmem:[%s1 + $0xd0] sm:$0xf]
  %v73 = vld [vmem:[%s1 + $0xd4] sm:$0xf]
  %v74 = vld [vmem:[%s1 + $0xd8] sm:$0xf]
  %v75 = vld [vmem:[%s1 + $0xdc] sm:$0xf]
  %v76 = vld [vmem:[%s1 + $0xe0] sm:$0xf]
  %v77 = vld [vmem:[%s1 + $0xe4] sm:$0xf]
  %v78 = vld [vmem:[%s1 + $0xe8] sm:$0xf]
  %v79 = vld [vmem:[%s1 + $0xec] sm:$0xf]
  %v80 = vld [vmem:[%s1 + $0xf0] sm:$0xf]
  %v81 = vld [vmem:[%s1 + $0xf4] sm:$0xf]
  %v82 = vld [vmem:[%s1 + $0xf8] sm:$0xf]
  %v83 = vld [vmem:[%s1 + $0xfc] sm:$0xf]
  %v84 = vld [vmem:[%s1 + $0x100] sm:$0xf]
  %v85 = vld [vmem:[%s1 + $0x104] sm:$0xf]
  %v86 = vld [vmem:[%s1 + $0x108] sm:$0xf]
  %v87 = vld [vmem:[%s1 + $0x10c] sm:$0xf]
  %v88 = vld [vmem:[%s1 + $0x110] sm:$0xf]
  %v89 = vld [vmem:[%s1 + $0x114] sm:$0xf]
  %v90 = vld [vmem:[%s1 + $0x118] sm:$0xf]
  %v91 = vld [vmem:[%s1 + $0x11c] sm:$0xf]
  %v92 = vld [vmem:[%s1 + $0x120] sm:$0xf]
  %v93 = vld [vmem:[%s1 + $0x124] sm:$0xf]
  %v94 = vld [vmem:[%s1 + $0x128] sm:$0xf]
  %v95 = vld [vmem:[%s1 + $0x12c] sm:$0xf]
  %v96 = vld [vmem:[%s1 + $0x130] sm:$0xf]
  %v97 = vld [vmem:[%s1 + $0x134] sm:$0xf]
  %v98 = vld [vmem:[%s1 + $0x138] sm:$0xf]
  %v99 = vld [vmem:[%s1 + $0x13c] sm:$0xf]
  %v100 = vld [vmem:[%s1 + $0x140] sm:$0xf]
  %v101 = vld [vmem:[%s1 + $0x144] sm:$0xf]
  %v102 = vld [vmem:[%s1 + $0x148] sm:$0xf]
  %v103 = vld [vmem:[%s1 + $0x14c] sm:$0xf]
  %v104 = vld [vmem:[%s1 + $0x150] sm:$0xf]
  %v105 = vld [vmem:[%s1 + $0x154] sm:$0xf]
  %v106 = vld [vmem:[%s1 + $0x158] sm:$0xf]
  %v107 = vld [vmem:[%s1 + $0x15c] sm:$0xf]
  %v108 = vld [vmem:[%s1 + $0x160] sm:$0xf]
  %v109 = vld [vmem:[%s1 + $0x164] sm:$0xf]
  %v110 = vld [vmem:[%s1 + $0x168] sm:$0xf]
  %v111 = vld [vmem:[%s1 + $0x16c] sm:$0xf]
  %v112 = vld [vmem:[%s1 + $0x170] sm:$0xf]
  %v113 = vld [vmem:[%s1 + $0x174] sm:$0xf]
  %v114 = vld [vmem:[%s1 + $0x178] sm:$0xf]
  %v115 = vld [vmem:[%s1 + $0x17c] sm:$0xf]
  %v116 = vld [vmem:[%s1 + $0x180] sm:$0xf]
  %v117 = vld [vmem:[%s1 + $0x184] sm:$0xf]
  %v118 = vld [vmem:[%s1 + $0x188] sm:$0xf]
  %v119 = vld [vmem:[%s1 + $0x18c] sm:$0xf]
  %v120 = vld [vmem:[%s1 + $0x190] sm:$0xf]
  %v121 = vld [vmem:[%s1 + $0x194] sm:$0xf]
  %v122 = vld [vmem:[%s1 + $0x198] sm:$0xf]
  %v123 = vld [vmem:[%s1 + $0x19c] sm:$0xf]
  %v124 = vld [vmem:[%s1 + $0x1a0] sm:$0xf]
  %v125 = vld [vmem:[%s1 + $0x1a4] sm:$0xf]
  %v126 = vld [vmem:[%s1 + $0x1a8] sm:$0xf]
  %v127 = vld [vmem:[%s1 + $0x1ac] sm:$0xf]
  %v128 = vld [vmem:[%s1 + $0x1b0] sm:$0xf]
  %v129 = vld [vmem:[%s1 + $0x1b4] sm:$0xf]
  %v130 = vld [vmem:[%s1 + $0x1b8] sm:$0xf]
  %v131 = vld [vmem:[%s1 + $0x1bc] sm:$0xf]
  %v132 = vld [vmem:[%s1 + $0x1c0] sm:$0xf]
  %v133 = vld [vmem:[%s1 + $0x1c4] sm:$0xf]
  %v134 = vld [vmem:[%s1 + $0x1c8] sm:$0xf]
  %v135 = vld [vmem:[%s1 + $0x1cc] sm:$0xf]
  %v136 = vld [vmem:[%s1 + $0x1d0] sm:$0xf]
  %v137 = vld [vmem:[%s1 + $0x1d4] sm:$0xf]
  %v138 = vld [vmem:[%s1 + $0x1d8] sm:$0xf]
  %v139 = vld [vmem:[%s1 + $0x1dc] sm:$0xf]
  %v140 = vld [vmem:[%s1 + $0x1e0] sm:$0xf]
  %v141 = vld [vmem:[%s1 + $0x1e4] sm:$0xf]
  %v142 = vld [vmem:[%s1 + $0x1e8] sm:$0xf]
  %v143 = vld [vmem:[%s1 + $0x1ec] sm:$0xf]
  %v144 = vld [vmem:[%s1 + $0x1f0] sm:$0xf]
  %v145 = vld [vmem:[%s1 + $0x1f4] sm:$0xf]
  %v146 = vld [vmem:[%s1 + $0x1f8] sm:$0xf]
  %v147 = vld [vmem:[%s1 + $0x1fc] sm:$0xf]
  %v148 = vld [vmem:[%s1 + $0x200] sm:$0xf]
  %v149 = vld [vmem:[%s1 + $0x204] sm:$0xf]
  %v150 = vld [vmem:[%s1 + $0x208] sm:$0xf]
  %v151 = vld [vmem:[%s1 + $0x20c] sm:$0xf]
  %v152 = vld [vmem:[%s1 + $0x210] sm:$0xf]
  %v153 = vld [vmem:[%s1 + $0x214] sm:$0xf]
  %v154 = vld [vmem:[%s1 + $0x218] sm:$0xf]
  %v155 = vld [vmem:[%s1 + $0x21c] sm:$0xf]
  %v156 = vld [vmem:[%s1 + $0x220] sm:$0xf]
  %v157 = vld [vmem:[%s1 + $0x224] sm:$0xf]
  %v158 = vld [vmem:[%s1 + $0x228] sm:$0xf]
  %v159 = vld [vmem:[%s1 + $0x22c] sm:$0xf]
  %v160 = vld [vmem:[%s1 + $0x230] sm:$0xf]
  %v161 = vld [vmem:[%s1 + $0x234] sm:$0xf]
  %v162 = vld [vmem:[%s1 + $0x238] sm:$0xf]
  %v163 = vld [vmem:[%s1 + $0x23c] sm:$0xf]
  %v164 = vld [vmem:[%s2] sm:$0x1]
  %v166 = vlaneseq
  %v167 = vshrl.u32 %v166, 7
  %v168 = vsub.s32 0, %v167
  %v169 = vrot.slane %v164, %v168
  %v176 = vunpack.c.l.b16 %v15
  %v177 = vunpack.c.h.b16 %v15
  %v178 = vunpack.c.l.b16 %v16
  %v179 = vunpack.c.h.b16 %v16
  %v180 = vunpack.c.l.b16 %v17
  %v181 = vunpack.c.h.b16 %v17
  %v182 = vunpack.c.l.b16 %v18
  %v183 = vunpack.c.h.b16 %v18
  %v184 = vunpack.c.l.b16 %v19
  %v185 = vpack.c.b16 %v176, %v176
  %v186 = vpack.c.b16 %v177, %v177
  %v187 = vpack.c.b16 %v178, %v178
  %v188 = vpack.c.b16 %v179, %v179
  %v189 = vpack.c.b16 %v180, %v180
  %v190 = vpack.c.b16 %v181, %v181
  %v191 = vpack.c.b16 %v182, %v182
  %v192 = vpack.c.b16 %v183, %v183
  %v193 = vpack.c.b16 %v184, %v184
  %v347 = vunpack.c.l.b16 %v20
  %v348 = vunpack.c.l.b16 %v21
  %v349 = vunpack.c.l.b16 %v22
  %v350 = vunpack.c.l.b16 %v23
  %v351 = vunpack.c.l.b16 %v24
  %v352 = vunpack.c.l.b16 %v25
  %v353 = vunpack.c.l.b16 %v26
  %v354 = vunpack.c.l.b16 %v27
  %v355 = vunpack.c.l.b16 %v28
  %v356 = vunpack.c.l.b16 %v29
  %v357 = vunpack.c.l.b16 %v30
  %v358 = vunpack.c.l.b16 %v31
  %v359 = vunpack.c.l.b16 %v32
  %v360 = vunpack.c.l.b16 %v33
  %v361 = vunpack.c.l.b16 %v34
  %v362 = vunpack.c.l.b16 %v35
  %v363 = vunpack.c.l.b16 %v36
  %v364 = vunpack.c.l.b16 %v37
  %v365 = vunpack.c.l.b16 %v38
  %v366 = vunpack.c.l.b16 %v39
  %v367 = vunpack.c.l.b16 %v40
  %v368 = vunpack.c.l.b16 %v41
  %v369 = vunpack.c.l.b16 %v42
  %v370 = vunpack.c.l.b16 %v43
  %v371 = vunpack.c.l.b16 %v44
  %v372 = vunpack.c.l.b16 %v45
  %v373 = vunpack.c.l.b16 %v46
  %v374 = vunpack.c.l.b16 %v47
  %v375 = vunpack.c.l.b16 %v48
  %v376 = vunpack.c.l.b16 %v49
  %v377 = vunpack.c.l.b16 %v50
  %v378 = vunpack.c.l.b16 %v51
  %v379 = vunpack.c.l.b16 %v52
  %v380 = vunpack.c.l.b16 %v53
  %v381 = vunpack.c.l.b16 %v54
  %v382 = vunpack.c.l.b16 %v55
  %v383 = vunpack.c.l.b16 %v56
  %v384 = vunpack.c.l.b16 %v57
  %v385 = vunpack.c.l.b16 %v58
  %v386 = vunpack.c.l.b16 %v59
  %v387 = vunpack.c.l.b16 %v60
  %v388 = vunpack.c.l.b16 %v61
  %v389 = vunpack.c.l.b16 %v62
  %v390 = vunpack.c.l.b16 %v63
  %v391 = vunpack.c.l.b16 %v64
  %v392 = vunpack.c.l.b16 %v65
  %v393 = vunpack.c.l.b16 %v66
  %v394 = vunpack.c.l.b16 %v67
  %v395 = vunpack.c.l.b16 %v68
  %v396 = vunpack.c.l.b16 %v69
  %v397 = vunpack.c.l.b16 %v70
  %v398 = vunpack.c.l.b16 %v71
  %v399 = vunpack.c.l.b16 %v72
  %v400 = vunpack.c.l.b16 %v73
  %v401 = vunpack.c.l.b16 %v74
  %v402 = vunpack.c.l.b16 %v75
  %v403 = vunpack.c.l.b16 %v76
  %v404 = vunpack.c.l.b16 %v77
  %v405 = vunpack.c.l.b16 %v78
  %v406 = vunpack.c.l.b16 %v79
  %v407 = vunpack.c.l.b16 %v80
  %v408 = vunpack.c.l.b16 %v81
  %v409 = vunpack.c.l.b16 %v82
  %v410 = vunpack.c.l.b16 %v83
  %v411 = vunpack.c.l.b16 %v84
  %v412 = vunpack.c.l.b16 %v85
  %v413 = vunpack.c.l.b16 %v86
  %v414 = vunpack.c.l.b16 %v87
  %v415 = vunpack.c.l.b16 %v88
  %v416 = vunpack.c.l.b16 %v89
  %v417 = vunpack.c.l.b16 %v90
  %v418 = vunpack.c.l.b16 %v91
  %v419 = vunpack.c.l.b16 %v92
  %v420 = vunpack.c.l.b16 %v93
  %v421 = vunpack.c.l.b16 %v94
  %v422 = vunpack.c.l.b16 %v95
  %v423 = vunpack.c.l.b16 %v96
  %v424 = vunpack.c.l.b16 %v97
  %v425 = vunpack.c.l.b16 %v98
  %v426 = vunpack.c.l.b16 %v99
  %v427 = vunpack.c.l.b16 %v100
  %v428 = vunpack.c.l.b16 %v101
  %v429 = vunpack.c.l.b16 %v102
  %v430 = vunpack.c.l.b16 %v103
  %v431 = vunpack.c.l.b16 %v104
  %v432 = vunpack.c.l.b16 %v105
  %v433 = vunpack.c.l.b16 %v106
  %v434 = vunpack.c.l.b16 %v107
  %v435 = vunpack.c.l.b16 %v108
  %v436 = vunpack.c.l.b16 %v109
  %v437 = vunpack.c.l.b16 %v110
  %v438 = vunpack.c.l.b16 %v111
  %v439 = vunpack.c.l.b16 %v112
  %v440 = vunpack.c.l.b16 %v113
  %v441 = vunpack.c.l.b16 %v114
  %v442 = vunpack.c.l.b16 %v115
  %v443 = vunpack.c.l.b16 %v116
  %v444 = vunpack.c.l.b16 %v117
  %v445 = vunpack.c.l.b16 %v118
  %v446 = vunpack.c.l.b16 %v119
  %v447 = vunpack.c.l.b16 %v120
  %v448 = vunpack.c.l.b16 %v121
  %v449 = vunpack.c.l.b16 %v122
  %v450 = vunpack.c.l.b16 %v123
  %v451 = vunpack.c.l.b16 %v124
  %v452 = vunpack.c.l.b16 %v125
  %v453 = vunpack.c.l.b16 %v126
  %v454 = vunpack.c.l.b16 %v127
  %v455 = vunpack.c.l.b16 %v128
  %v456 = vunpack.c.l.b16 %v129
  %v457 = vunpack.c.l.b16 %v130
  %v458 = vunpack.c.l.b16 %v131
  %v459 = vunpack.c.l.b16 %v132
  %v460 = vunpack.c.l.b16 %v133
  %v461 = vunpack.c.l.b16 %v134
  %v462 = vunpack.c.l.b16 %v135
  %v463 = vunpack.c.l.b16 %v136
  %v464 = vunpack.c.l.b16 %v137
  %v465 = vunpack.c.l.b16 %v138
  %v466 = vunpack.c.l.b16 %v139
  %v467 = vunpack.c.l.b16 %v140
  %v468 = vunpack.c.l.b16 %v141
  %v469 = vunpack.c.l.b16 %v142
  %v470 = vunpack.c.l.b16 %v143
  %v471 = vunpack.c.l.b16 %v144
  %v472 = vunpack.c.l.b16 %v145
  %v473 = vunpack.c.l.b16 %v146
  %v474 = vunpack.c.l.b16 %v147
  %v475 = vunpack.c.l.b16 %v148
  %v476 = vunpack.c.l.b16 %v149
  %v477 = vunpack.c.l.b16 %v150
  %v478 = vunpack.c.l.b16 %v151
  %v479 = vunpack.c.l.b16 %v152
  %v480 = vunpack.c.l.b16 %v153
  %v481 = vunpack.c.l.b16 %v154
  %v482 = vunpack.c.l.b16 %v155
  %v483 = vunpack.c.l.b16 %v156
  %v484 = vunpack.c.l.b16 %v157
  %v485 = vunpack.c.l.b16 %v158
  %v486 = vunpack.c.l.b16 %v159
  %v487 = vunpack.c.l.b16 %v160
  %v488 = vunpack.c.l.b16 %v161
  %v489 = vunpack.c.l.b16 %v162
  %v490 = vunpack.c.l.b16 %v163
  %v491 = vpack.c.b16 %v348, %v347
  %v492 = vpack.c.b16 %v350, %v349
  %v493 = vpack.c.b16 %v352, %v351
  %v494 = vpack.c.b16 %v354, %v353
  %v495 = vpack.c.b16 %v356, %v355
  %v496 = vpack.c.b16 %v358, %v357
  %v497 = vpack.c.b16 %v360, %v359
  %v498 = vpack.c.b16 %v362, %v361
  %v499 = vpack.c.b16 %v364, %v363
  %v500 = vpack.c.b16 %v366, %v365
  %v501 = vpack.c.b16 %v368, %v367
  %v502 = vpack.c.b16 %v370, %v369
  %v503 = vpack.c.b16 %v372, %v371
  %v504 = vpack.c.b16 %v374, %v373
  %v505 = vpack.c.b16 %v376, %v375
  %v506 = vpack.c.b16 %v378, %v377
  %v507 = vpack.c.b16 %v380, %v379
  %v508 = vpack.c.b16 %v382, %v381
  %v509 = vpack.c.b16 %v384, %v383
  %v510 = vpack.c.b16 %v386, %v385
  %v511 = vpack.c.b16 %v388, %v387
  %v512 = vpack.c.b16 %v390, %v389
  %v513 = vpack.c.b16 %v392, %v391
  %v514 = vpack.c.b16 %v394, %v393
  %v515 = vpack.c.b16 %v396, %v395
  %v516 = vpack.c.b16 %v398, %v397
  %v517 = vpack.c.b16 %v400, %v399
  %v518 = vpack.c.b16 %v402, %v401
  %v519 = vpack.c.b16 %v404, %v403
  %v520 = vpack.c.b16 %v406, %v405
  %v521 = vpack.c.b16 %v408, %v407
  %v522 = vpack.c.b16 %v410, %v409
  %v523 = vpack.c.b16 %v412, %v411
  %v524 = vpack.c.b16 %v414, %v413
  %v525 = vpack.c.b16 %v416, %v415
  %v526 = vpack.c.b16 %v418, %v417
  %v527 = vpack.c.b16 %v420, %v419
  %v528 = vpack.c.b16 %v422, %v421
  %v529 = vpack.c.b16 %v424, %v423
  %v530 = vpack.c.b16 %v426, %v425
  %v531 = vpack.c.b16 %v428, %v427
  %v532 = vpack.c.b16 %v430, %v429
  %v533 = vpack.c.b16 %v432, %v431
  %v534 = vpack.c.b16 %v434, %v433
  %v535 = vpack.c.b16 %v436, %v435
  %v536 = vpack.c.b16 %v438, %v437
  %v537 = vpack.c.b16 %v440, %v439
  %v538 = vpack.c.b16 %v442, %v441
  %v539 = vpack.c.b16 %v444, %v443
  %v540 = vpack.c.b16 %v446, %v445
  %v541 = vpack.c.b16 %v448, %v447
  %v542 = vpack.c.b16 %v450, %v449
  %v543 = vpack.c.b16 %v452, %v451
  %v544 = vpack.c.b16 %v454, %v453
  %v545 = vpack.c.b16 %v456, %v455
  %v546 = vpack.c.b16 %v458, %v457
  %v547 = vpack.c.b16 %v460, %v459
  %v548 = vpack.c.b16 %v462, %v461
  %v549 = vpack.c.b16 %v464, %v463
  %v550 = vpack.c.b16 %v466, %v465
  %v551 = vpack.c.b16 %v468, %v467
  %v552 = vpack.c.b16 %v470, %v469
  %v553 = vpack.c.b16 %v472, %v471
  %v554 = vpack.c.b16 %v474, %v473
  %v555 = vpack.c.b16 %v476, %v475
  %v556 = vpack.c.b16 %v478, %v477
  %v557 = vpack.c.b16 %v480, %v479
  %v558 = vpack.c.b16 %v482, %v481
  %v559 = vpack.c.b16 %v484, %v483
  %v560 = vpack.c.b16 %v486, %v485
  %v561 = vpack.c.b16 %v488, %v487
  %v562 = vpack.c.b16 %v490, %v489
  %635 = vmatprep.subr.bf16.mxu0 0
  %636 = vmatpush1.bf16.msra.mxu0 %v491
  %637 = vmatprep.subr.bf16.mxu0 0
  %638 = vmatpush1.bf16.msra.mxu0 %v492
  %639 = vmatprep.subr.bf16.mxu0 0
  %640 = vmatpush1.bf16.msra.mxu0 %v493
  %641 = vmatprep.subr.bf16.mxu0 0
  %642 = vmatpush1.bf16.msra.mxu0 %v494
  %643 = vmatprep.subr.bf16.mxu0 0
  %644 = vmatpush1.bf16.msra.mxu0 %v495
  %645 = vmatprep.subr.bf16.mxu0 0
  %646 = vmatpush1.bf16.msra.mxu0 %v496
  %647 = vmatprep.subr.bf16.mxu0 0
  %648 = vmatpush1.bf16.msra.mxu0 %v497
  %649 = vmatprep.subr.bf16.mxu0 0
  %650 = vmatpush1.bf16.msra.mxu0 %v498
  %651 = vmatprep.subr.bf16.mxu0 0
  %652 = vmatpush1.bf16.msra.mxu0 %v499
  %653 = vmatprep.subr.bf16.mxu0 0
  %654 = vmatpush1.bf16.msra.mxu0 %v500
  %655 = vmatprep.subr.bf16.mxu0 0
  %656 = vmatpush1.bf16.msra.mxu0 %v501
  %657 = vmatprep.subr.bf16.mxu0 0
  %658 = vmatpush1.bf16.msra.mxu0 %v502
  %659 = vmatprep.subr.bf16.mxu0 0
  %660 = vmatpush1.bf16.msra.mxu0 %v503
  %661 = vmatprep.subr.bf16.mxu0 0
  %662 = vmatpush1.bf16.msra.mxu0 %v504
  %663 = vmatprep.subr.bf16.mxu0 0
  %664 = vmatpush1.bf16.msra.mxu0 %v505
  %665 = vmatprep.subr.bf16.mxu0 0
  %666 = vmatpush1.bf16.msra.mxu0 %v506
  %667 = vmatprep.mubr.bf16.mxu0 %v186
  %668 = vmatmul.mubr.bf16.gmra.mrb[0].mxu0 %v185
  %v669 = vpop.f32.mrb[0].mxu0
  %v670 = vadd.f32 %v169, %v669
  %v671 = vpop.f32.mrb[0].mxu0
  %v672 = vpop.f32.mrb[0].mxu0
  %v673 = vpop.f32.mrb[0].mxu0
  %674 = vdwg.mxu0
  %675 = vmatprep.subr.bf16.mxu0 0
  %676 = vmatpush1.bf16.msra.mxu0 %v507
  %677 = vmatprep.subr.bf16.mxu0 0
  %678 = vmatpush1.bf16.msra.mxu0 %v508
  %679 = vmatprep.subr.bf16.mxu0 0
  %680 = vmatpush1.bf16.msra.mxu0 %v509
  %681 = vmatprep.subr.bf16.mxu0 0
  %682 = vmatpush1.bf16.msra.mxu0 %v510
  %683 = vmatprep.subr.bf16.mxu0 0
  %684 = vmatpush1.bf16.msra.mxu0 %v511
  %685 = vmatprep.subr.bf16.mxu0 0
  %686 = vmatpush1.bf16.msra.mxu0 %v512
  %687 = vmatprep.subr.bf16.mxu0 0
  %688 = vmatpush1.bf16.msra.mxu0 %v513
  %689 = vmatprep.subr.bf16.mxu0 0
  %690 = vmatpush1.bf16.msra.mxu0 %v514
  %691 = vmatprep.subr.bf16.mxu0 0
  %692 = vmatpush1.bf16.msra.mxu0 %v515
  %693 = vmatprep.subr.bf16.mxu0 0
  %694 = vmatpush1.bf16.msra.mxu0 %v516
  %695 = vmatprep.subr.bf16.mxu0 0
  %696 = vmatpush1.bf16.msra.mxu0 %v517
  %697 = vmatprep.subr.bf16.mxu0 0
  %698 = vmatpush1.bf16.msra.mxu0 %v518
  %699 = vmatprep.subr.bf16.mxu0 0
  %700 = vmatpush1.bf16.msra.mxu0 %v519
  %701 = vmatprep.subr.bf16.mxu0 0
  %702 = vmatpush1.bf16.msra.mxu0 %v520
  %703 = vmatprep.subr.bf16.mxu0 0
  %704 = vmatpush1.bf16.msra.mxu0 %v521
  %705 = vmatprep.subr.bf16.mxu0 0
  %706 = vmatpush1.bf16.msra.mxu0 %v522
  %707 = vmatprep.mubr.bf16.mxu0 %v188
  %708 = vmatmul.mubr.bf16.gmra.mrb[0].mxu0 %v187
  %v709 = vpop.f32.mrb[0].mxu0
  %v710 = vadd.f32 %v670, %v709
  %v711 = vpop.f32.mrb[0].mxu0
  %v712 = vpop.f32.mrb[0].mxu0
  %v713 = vpop.f32.mrb[0].mxu0
  %714 = vdwg.mxu0
  %715 = vmatprep.subr.bf16.mxu0 0
  %716 = vmatpush1.bf16.msra.mxu0 %v523
  %717 = vmatprep.subr.bf16.mxu0 0
  %718 = vmatpush1.bf16.msra.mxu0 %v524
  %719 = vmatprep.subr.bf16.mxu0 0
  %720 = vmatpush1.bf16.msra.mxu0 %v525
  %721 = vmatprep.subr.bf16.mxu0 0
  %722 = vmatpush1.bf16.msra.mxu0 %v526
  %723 = vmatprep.subr.bf16.mxu0 0
  %724 = vmatpush1.bf16.msra.mxu0 %v527
  %725 = vmatprep.subr.bf16.mxu0 0
  %726 = vmatpush1.bf16.msra.mxu0 %v528
  %727 = vmatprep.subr.bf16.mxu0 0
  %728 = vmatpush1.bf16.msra.mxu0 %v529
  %729 = vmatprep.subr.bf16.mxu0 0
  %730 = vmatpush1.bf16.msra.mxu0 %v530
  %731 = vmatprep.subr.bf16.mxu0 0
  %732 = vmatpush1.bf16.msra.mxu0 %v531
  %733 = vmatprep.subr.bf16.mxu0 0
  %734 = vmatpush1.bf16.msra.mxu0 %v532
  %735 = vmatprep.subr.bf16.mxu0 0
  %736 = vmatpush1.bf16.msra.mxu0 %v533
  %737 = vmatprep.subr.bf16.mxu0 0
  %738 = vmatpush1.bf16.msra.mxu0 %v534
  %739 = vmatprep.subr.bf16.mxu0 0
  %740 = vmatpush1.bf16.msra.mxu0 %v535
  %741 = vmatprep.subr.bf16.mxu0 0
  %742 = vmatpush1.bf16.msra.mxu0 %v536
  %743 = vmatprep.subr.bf16.mxu0 0
  %744 = vmatpush1.bf16.msra.mxu0 %v537
  %745 = vmatprep.subr.bf16.mxu0 0
  %746 = vmatpush1.bf16.msra.mxu0 %v538
  %747 = vmatprep.mubr.bf16.mxu0 %v190
  %748 = vmatmul.mubr.bf16.gmra.mrb[0].mxu0 %v189
  %v749 = vpop.f32.mrb[0].mxu0
  %v750 = vadd.f32 %v710, %v749
  %v751 = vpop.f32.mrb[0].mxu0
  %v752 = vpop.f32.mrb[0].mxu0
  %v753 = vpop.f32.mrb[0].mxu0
  %754 = vdwg.mxu0
  %755 = vmatprep.subr.bf16.mxu0 0
  %756 = vmatpush1.bf16.msra.mxu0 %v539
  %757 = vmatprep.subr.bf16.mxu0 0
  %758 = vmatpush1.bf16.msra.mxu0 %v540
  %759 = vmatprep.subr.bf16.mxu0 0
  %760 = vmatpush1.bf16.msra.mxu0 %v541
  %761 = vmatprep.subr.bf16.mxu0 0
  %762 = vmatpush1.bf16.msra.mxu0 %v542
  %763 = vmatprep.subr.bf16.mxu0 0
  %764 = vmatpush1.bf16.msra.mxu0 %v543
  %765 = vmatprep.subr.bf16.mxu0 0
  %766 = vmatpush1.bf16.msra.mxu0 %v544
  %767 = vmatprep.subr.bf16.mxu0 0
  %768 = vmatpush1.bf16.msra.mxu0 %v545
  %769 = vmatprep.subr.bf16.mxu0 0
  %770 = vmatpush1.bf16.msra.mxu0 %v546
  %771 = vmatprep.subr.bf16.mxu0 0
  %772 = vmatpush1.bf16.msra.mxu0 %v547
  %773 = vmatprep.subr.bf16.mxu0 0
  %774 = vmatpush1.bf16.msra.mxu0 %v548
  %775 = vmatprep.subr.bf16.mxu0 0
  %776 = vmatpush1.bf16.msra.mxu0 %v549
  %777 = vmatprep.subr.bf16.mxu0 0
  %778 = vmatpush1.bf16.msra.mxu0 %v550
  %779 = vmatprep.subr.bf16.mxu0 0
  %780 = vmatpush1.bf16.msra.mxu0 %v551
  %781 = vmatprep.subr.bf16.mxu0 0
  %782 = vmatpush1.bf16.msra.mxu0 %v552
  %783 = vmatprep.subr.bf16.mxu0 0
  %784 = vmatpush1.bf16.msra.mxu0 %v553
  %785 = vmatprep.subr.bf16.mxu0 0
  %786 = vmatpush1.bf16.msra.mxu0 %v554
  %787 = vmatprep.mubr.bf16.mxu0 %v192
  %788 = vmatmul.mubr.bf16.gmra.mrb[0].mxu0 %v191
  %v789 = vpop.f32.mrb[0].mxu0
  %v790 = vadd.f32 %v750, %v789
  %v791 = vpop.f32.mrb[0].mxu0
  %v792 = vpop.f32.mrb[0].mxu0
  %v793 = vpop.f32.mrb[0].mxu0
  %794 = vdwg.mxu0
  %795 = vmatprep.subr.bf16.mxu0 0
  %796 = vmatpush1.bf16.msra.mxu0 %v555
  %797 = vmatprep.subr.bf16.mxu0 0
  %798 = vmatpush1.bf16.msra.mxu0 %v556
  %799 = vmatprep.subr.bf16.mxu0 0
  %800 = vmatpush1.bf16.msra.mxu0 %v557
  %801 = vmatprep.subr.bf16.mxu0 0
  %802 = vmatpush1.bf16.msra.mxu0 %v558
  %803 = vmatprep.subr.bf16.mxu0 0
  %804 = vmatpush1.bf16.msra.mxu0 %v559
  %805 = vmatprep.subr.bf16.mxu0 0
  %806 = vmatpush1.bf16.msra.mxu0 %v560
  %807 = vmatprep.subr.bf16.mxu0 0
  %808 = vmatpush1.bf16.msra.mxu0 %v561
  %809 = vmatprep.subr.bf16.mxu0 0
  %810 = vmatpush1.bf16.msra.mxu0 %v562
  %811 = vmatprep.subr.bf16.mxu0 0
  %812 = vmatpush1.bf16.msra.mxu0 0
  %813 = vmatprep.subr.bf16.mxu0 0
  %814 = vmatpush1.bf16.msra.mxu0 0
  %815 = vmatprep.subr.bf16.mxu0 0
  %816 = vmatpush1.bf16.msra.mxu0 0
  %817 = vmatprep.subr.bf16.mxu0 0
  %818 = vmatpush1.bf16.msra.mxu0 0
  %819 = vmatprep.subr.bf16.mxu0 0
  %820 = vmatpush1.bf16.msra.mxu0 0
  %821 = vmatprep.subr.bf16.mxu0 0
  %822 = vmatpush1.bf16.msra.mxu0 0
  %823 = vmatprep.subr.bf16.mxu0 0
  %824 = vmatpush1.bf16.msra.mxu0 0
  %825 = vmatprep.subr.bf16.mxu0 0
  %826 = vmatpush1.bf16.msra.mxu0 0
  %827 = vmatprep.mubr.bf16.mxu0 0
  %828 = vmatmul.mubr.bf16.gmra.mrb[0].mxu0 %v193
  %v829 = vpop.f32.mrb[0].mxu0
  %v830 = vadd.f32 %v790, %v829
  %v831 = vpop.f32.mrb[0].mxu0
  %v832 = vpop.f32.mrb[0].mxu0
  %v833 = vpop.f32.mrb[0].mxu0
  %834 = vdwg.mxu0
  %v835 = vmax.f32 %v830, 0.0
  %v836 = vpack.c.bf16 %v835, %v835
  %837 = vst [vmem:[%s3] sm:$0xf] %v836
  // Predicated region
  $region14: #{dqn_forward.6} parent=0 // pred_check
    _
  $region15: #{dqn_forward.6} parent=0 // pred_check_branch
    %839 = sbr.rel (0) target = $region17
  $region16: #{dqn_forward.6} parent=0 // pred_region
    _
  $region17: #{dqn_forward.6} parent=0 // pred_fallthru
    _
  // Predicated region
  $region18: #{dqn_forward.6} parent=0 // pred_check
    _
  $region19: #{dqn_forward.6} parent=0 // pred_check_branch
    %841 = sbr.rel (0) target = $region21
  $region20: #{dqn_forward.6} parent=0 // pred_region
    _
  $region21: #{dqn_forward.6} parent=0 // pred_fallthru
    _

// kernel: dqn_forward.7
$region0: #{dqn_forward.7}
  #allocation0 [shape = 'u32[]', space=smem, size = 0x4, offset = 0x4, fixed_abs, tag = 'smem constant byte address 0x4 - core index']
  #allocation1 [shape = 'u32[144,128]{1,0:T(1,128)}', space=vmem, size = 0x12000, scoped, tag = 'internal scratch']
  %s0 = inlined_call_operand.vmem [shape: bf16[8,256], index: 0, kind: input, shape index: {}]
  %s1 = inlined_call_operand.vmem [shape: bf16[256,512], index: 1, kind: input, shape index: {}]
  %s2 = inlined_call_operand.vmem [shape: f32[1,512], index: 2, kind: input, shape index: {}]
  %s3 = inlined_call_operand.vmem [shape: bf16[512,128], index: 3, kind: input, shape index: {}]
  %s4 = inlined_call_operand.vmem [shape: f32[1,128], index: 4, kind: input, shape index: {}]
  %s5 = inlined_call_operand.vmem [shape: f32[8,128], index: 5, kind: output, shape index: {}]
  %s6 = sld [smem:[#allocation0]]
  $region30: #{dqn_forward.7} parent=0
    _
  %s8 = ssub.s32 1, %s6
  %s9 = scalar_select 0, %s8, %s6
  // Predicated region
  $region2: #{dqn_forward.7} parent=0 // pred_check
    _
  $region3: #{dqn_forward.7} parent=0 // pred_check_branch
    %11 = sbr.rel (0) target = $region5
  $region4: #{dqn_forward.7} parent=0 // pred_region
    _
  $region5: #{dqn_forward.7} parent=0 // pred_fallthru
    _
  // Predicated region
  $region6: #{dqn_forward.7} parent=0 // pred_check
    _
  $region7: #{dqn_forward.7} parent=0 // pred_check_branch
    %13 = sbr.rel (0) target = $region9
  $region8: #{dqn_forward.7} parent=0 // pred_region
    _
  $region9: #{dqn_forward.7} parent=0 // pred_fallthru
    _
  // Predicated region
  $region10: #{dqn_forward.7} parent=0 // pred_check
    _
  $region11: #{dqn_forward.7} parent=0 // pred_check_branch
    %15 = sbr.rel (0) target = $region13
  $region12: #{dqn_forward.7} parent=0 // pred_region
    _
  $region13: #{dqn_forward.7} parent=0 // pred_fallthru
    _
  // Predicated region
  $region14: #{dqn_forward.7} parent=0 // pred_check
    _
  $region15: #{dqn_forward.7} parent=0 // pred_check_branch
    %17 = sbr.rel (0) target = $region17
  $region16: #{dqn_forward.7} parent=0 // pred_region
    _
  $region17: #{dqn_forward.7} parent=0 // pred_fallthru
    _
  // Predicated region
  $region18: #{dqn_forward.7} parent=0 // pred_check
    _
  $region19: #{dqn_forward.7} parent=0 // pred_check_branch
    %19 = sbr.rel (0) target = $region21
  $region20: #{dqn_forward.7} parent=0 // pred_region
    _
  $region21: #{dqn_forward.7} parent=0 // pred_fallthru
    _
  %v21 = vld [vmem:[%s0] sm:$0xff]
  %v22 = vld [vmem:[%s1] sm:$0xff]
  %v23 = vld [vmem:[%s1 + $0x8] sm:$0xff]
  %v24 = vld [vmem:[%s1 + $0x10] sm:$0xff]
  %v25 = vld [vmem:[%s1 + $0x18] sm:$0xff]
  %v26 = vld [vmem:[%s1 + $0x20] sm:$0xff]
  %v27 = vld [vmem:[%s1 + $0x28] sm:$0xff]
  %v28 = vld [vmem:[%s1 + $0x30] sm:$0xff]
  %v29 = vld [vmem:[%s1 + $0x38] sm:$0xff]
  %v30 = vld [vmem:[%s1 + $0x40] sm:$0xff]
  %v31 = vld [vmem:[%s1 + $0x48] sm:$0xff]
  %v32 = vld [vmem:[%s1 + $0x50] sm:$0xff]
  %v33 = vld [vmem:[%s1 + $0x58] sm:$0xff]
  %v34 = vld [vmem:[%s1 + $0x60] sm:$0xff]
  %v35 = vld [vmem:[%s1 + $0x68] sm:$0xff]
  %v36 = vld [vmem:[%s1 + $0x70] sm:$0xff]
  %v37 = vld [vmem:[%s1 + $0x78] sm:$0xff]
  %v38 = vld [vmem:[%s1 + $0x80] sm:$0xff]
  %v39 = vld [vmem:[%s1 + $0x88] sm:$0xff]
  %v40 = vld [vmem:[%s1 + $0x90] sm:$0xff]
  %v41 = vld [vmem:[%s1 + $0x98] sm:$0xff]
  %v42 = vld [vmem:[%s1 + $0xa0] sm:$0xff]
  %v43 = vld [vmem:[%s1 + $0xa8] sm:$0xff]
  %v44 = vld [vmem:[%s1 + $0xb0] sm:$0xff]
  %v45 = vld [vmem:[%s1 + $0xb8] sm:$0xff]
  %v46 = vld [vmem:[%s1 + $0xc0] sm:$0xff]
  %v47 = vld [vmem:[%s1 + $0xc8] sm:$0xff]
  %v48 = vld [vmem:[%s1 + $0xd0] sm:$0xff]
  %v49 = vld [vmem:[%s1 + $0xd8] sm:$0xff]
  %v50 = vld [vmem:[%s1 + $0xe0] sm:$0xff]
  %v51 = vld [vmem:[%s1 + $0xe8] sm:$0xff]
  %v52 = vld [vmem:[%s1 + $0xf0] sm:$0xff]
  %v53 = vld [vmem:[%s1 + $0xf8] sm:$0xff]
  %v54 = vld [vmem:[%s1 + $0x100] sm:$0xff]
  %v55 = vld [vmem:[%s1 + $0x108] sm:$0xff]
  %v56 = vld [vmem:[%s1 + $0x110] sm:$0xff]
  %v57 = vld [vmem:[%s1 + $0x118] sm:$0xff]
  %v58 = vld [vmem:[%s1 + $0x120] sm:$0xff]
  %v59 = vld [vmem:[%s1 + $0x128] sm:$0xff]
  %v60 = vld [vmem:[%s1 + $0x130] sm:$0xff]
  %v61 = vld [vmem:[%s1 + $0x138] sm:$0xff]
  %v62 = vld [vmem:[%s1 + $0x140] sm:$0xff]
  %v63 = vld [vmem:[%s1 + $0x148] sm:$0xff]
  %v64 = vld [vmem:[%s1 + $0x150] sm:$0xff]
  %v65 = vld [vmem:[%s1 + $0x158] sm:$0xff]
  %v66 = vld [vmem:[%s1 + $0x160] sm:$0xff]
  %v67 = vld [vmem:[%s1 + $0x168] sm:$0xff]
  %v68 = vld [vmem:[%s1 + $0x170] sm:$0xff]
  %v69 = vld [vmem:[%s1 + $0x178] sm:$0xff]
  %v70 = vld [vmem:[%s1 + $0x180] sm:$0xff]
  %v71 = vld [vmem:[%s1 + $0x188] sm:$0xff]
  %v72 = vld [vmem:[%s1 + $0x190] sm:$0xff]
  %v73 = vld [vmem:[%s1 + $0x198] sm:$0xff]
  %v74 = vld [vmem:[%s1 + $0x1a0] sm:$0xff]
  %v75 = vld [vmem:[%s1 + $0x1a8] sm:$0xff]
  %v76 = vld [vmem:[%s1 + $0x1b0] sm:$0xff]
  %v77 = vld [vmem:[%s1 + $0x1b8] sm:$0xff]
  %v78 = vld [vmem:[%s1 + $0x1c0] sm:$0xff]
  %v79 = vld [vmem:[%s1 + $0x1c8] sm:$0xff]
  %v80 = vld [vmem:[%s1 + $0x1d0] sm:$0xff]
  %v81 = vld [vmem:[%s1 + $0x1d8] sm:$0xff]
  %v82 = vld [vmem:[%s1 + $0x1e0] sm:$0xff]
  %v83 = vld [vmem:[%s1 + $0x1e8] sm:$0xff]
  %v84 = vld [vmem:[%s1 + $0x1f0] sm:$0xff]
  %v85 = vld [vmem:[%s1 + $0x1f8] sm:$0xff]
  %v86 = vld [vmem:[%s2] sm:$0xf]
  %v88 = vlaneseq
  %v89 = vshrl.u32 %v88, 7
  %v90 = vsub.s32 0, %v89
  %v91 = vrot.slane %v86, %v90
  %v92 = vlaneseq
  %v93 = vshrl.u32 %v92, 7
  %v94 = vsub.s32 1, %v93
  %v95 = vrot.slane %v86, %v94
  %v96 = vlaneseq
  %v97 = vshrl.u32 %v96, 7
  %v98 = vsub.s32 2, %v97
  %v99 = vrot.slane %v86, %v98
  %v100 = vlaneseq
  %v101 = vshrl.u32 %v100, 7
  %v102 = vsub.s32 3, %v101
  %v103 = vrot.slane %v86, %v102
  %v109 = vunpack.c.l.b16 %v21
  %v110 = vunpack.c.h.b16 %v21
  %v111 = vpack.c.b16 %v109, %v109
  %v112 = vpack.c.b16 %v110, %v110
  %v179 = vunpack.c.l.b16 %v22
  %v180 = vunpack.c.h.b16 %v22
  %v181 = vunpack.c.l.b16 %v23
  %v182 = vunpack.c.h.b16 %v23
  %v183 = vunpack.c.l.b16 %v24
  %v184 = vunpack.c.h.b16 %v24
  %v185 = vunpack.c.l.b16 %v25
  %v186 = vunpack.c.h.b16 %v25
  %v187 = vunpack.c.l.b16 %v26
  %v188 = vunpack.c.h.b16 %v26
  %v189 = vunpack.c.l.b16 %v27
  %v190 = vunpack.c.h.b16 %v27
  %v191 = vunpack.c.l.b16 %v28
  %v192 = vunpack.c.h.b16 %v28
  %v193 = vunpack.c.l.b16 %v29
  %v194 = vunpack.c.h.b16 %v29
  %v195 = vunpack.c.l.b16 %v30
  %v196 = vunpack.c.h.b16 %v30
  %v197 = vunpack.c.l.b16 %v31
  %v198 = vunpack.c.h.b16 %v31
  %v199 = vunpack.c.l.b16 %v32
  %v200 = vunpack.c.h.b16 %v32
  %v201 = vunpack.c.l.b16 %v33
  %v202 = vunpack.c.h.b16 %v33
  %v203 = vunpack.c.l.b16 %v34
  %v204 = vunpack.c.h.b16 %v34
  %v205 = vunpack.c.l.b16 %v35
  %v206 = vunpack.c.h.b16 %v35
  %v207 = vunpack.c.l.b16 %v36
  %v208 = vunpack.c.h.b16 %v36
  %v209 = vunpack.c.l.b16 %v37
  %v210 = vunpack.c.h.b16 %v37
  %v211 = vunpack.c.l.b16 %v38
  %v212 = vunpack.c.h.b16 %v38
  %v213 = vunpack.c.l.b16 %v39
  %v214 = vunpack.c.h.b16 %v39
  %v215 = vunpack.c.l.b16 %v40
  %v216 = vunpack.c.h.b16 %v40
  %v217 = vunpack.c.l.b16 %v41
  %v218 = vunpack.c.h.b16 %v41
  %v219 = vunpack.c.l.b16 %v42
  %v220 = vunpack.c.h.b16 %v42
  %v221 = vunpack.c.l.b16 %v43
  %v222 = vunpack.c.h.b16 %v43
  %v223 = vunpack.c.l.b16 %v44
  %v224 = vunpack.c.h.b16 %v44
  %v225 = vunpack.c.l.b16 %v45
  %v226 = vunpack.c.h.b16 %v45
  %v227 = vunpack.c.l.b16 %v46
  %v228 = vunpack.c.h.b16 %v46
  %v229 = vunpack.c.l.b16 %v47
  %v230 = vunpack.c.h.b16 %v47
  %v231 = vunpack.c.l.b16 %v48
  %v232 = vunpack.c.h.b16 %v48
  %v233 = vunpack.c.l.b16 %v49
  %v234 = vunpack.c.h.b16 %v49
  %v235 = vunpack.c.l.b16 %v50
  %v236 = vunpack.c.h.b16 %v50
  %v237 = vunpack.c.l.b16 %v51
  %v238 = vunpack.c.h.b16 %v51
  %v239 = vunpack.c.l.b16 %v52
  %v240 = vunpack.c.h.b16 %v52
  %v241 = vunpack.c.l.b16 %v53
  %v242 = vunpack.c.h.b16 %v53
  %v243 = vunpack.c.l.b16 %v54
  %v244 = vunpack.c.h.b16 %v54
  %v245 = vunpack.c.l.b16 %v55
  %v246 = vunpack.c.h.b16 %v55
  %v247 = vunpack.c.l.b16 %v56
  %v248 = vunpack.c.h.b16 %v56
  %v249 = vunpack.c.l.b16 %v57
  %v250 = vunpack.c.h.b16 %v57
  %v251 = vunpack.c.l.b16 %v58
  %v252 = vunpack.c.h.b16 %v58
  %v253 = vunpack.c.l.b16 %v59
  %v254 = vunpack.c.h.b16 %v59
  %v255 = vunpack.c.l.b16 %v60
  %v256 = vunpack.c.h.b16 %v60
  %v257 = vunpack.c.l.b16 %v61
  %v258 = vunpack.c.h.b16 %v61
  %v259 = vunpack.c.l.b16 %v62
  %v260 = vunpack.c.h.b16 %v62
  %v261 = vunpack.c.l.b16 %v63
  %v262 = vunpack.c.h.b16 %v63
  %v263 = vunpack.c.l.b16 %v64
  %v264 = vunpack.c.h.b16 %v64
  %v265 = vunpack.c.l.b16 %v65
  %v266 = vunpack.c.h.b16 %v65
  %v267 = vunpack.c.l.b16 %v66
  %v268 = vunpack.c.h.b16 %v66
  %v269 = vunpack.c.l.b16 %v67
  %v270 = vunpack.c.h.b16 %v67
  %v271 = vunpack.c.l.b16 %v68
  %v272 = vunpack.c.h.b16 %v68
  %v273 = vunpack.c.l.b16 %v69
  %v274 = vunpack.c.h.b16 %v69
  %v275 = vunpack.c.l.b16 %v70
  %v276 = vunpack.c.h.b16 %v70
  %v277 = vunpack.c.l.b16 %v71
  %v278 = vunpack.c.h.b16 %v71
  %v279 = vunpack.c.l.b16 %v72
  %v280 = vunpack.c.h.b16 %v72
  %v281 = vunpack.c.l.b16 %v73
  %v282 = vunpack.c.h.b16 %v73
  %v283 = vunpack.c.l.b16 %v74
  %v284 = vunpack.c.h.b16 %v74
  %v285 = vunpack.c.l.b16 %v75
  %v286 = vunpack.c.h.b16 %v75
  %v287 = vunpack.c.l.b16 %v76
  %v288 = vunpack.c.h.b16 %v76
  %v289 = vunpack.c.l.b16 %v77
  %v290 = vunpack.c.h.b16 %v77
  %v291 = vunpack.c.l.b16 %v78
  %v292 = vunpack.c.h.b16 %v78
  %v293 = vunpack.c.l.b16 %v79
  %v294 = vunpack.c.h.b16 %v79
  %v295 = vunpack.c.l.b16 %v80
  %v296 = vunpack.c.h.b16 %v80
  %v297 = vunpack.c.l.b16 %v81
  %v298 = vunpack.c.h.b16 %v81
  %v299 = vunpack.c.l.b16 %v82
  %v300 = vunpack.c.h.b16 %v82
  %v301 = vunpack.c.l.b16 %v83
  %v302 = vunpack.c.h.b16 %v83
  %v303 = vunpack.c.l.b16 %v84
  %v304 = vunpack.c.h.b16 %v84
  %v305 = vunpack.c.l.b16 %v85
  %v306 = vunpack.c.h.b16 %v85
  %v307 = vpack.c.b16 %v183, %v179
  %v308 = vpack.c.b16 %v184, %v180
  %v309 = vpack.c.b16 %v185, %v181
  %v310 = vpack.c.b16 %v186, %v182
  %v311 = vpack.c.b16 %v191, %v187
  %v312 = vpack.c.b16 %v192, %v188
  %v313 = vpack.c.b16 %v193, %v189
  %v314 = vpack.c.b16 %v194, %v190
  %v315 = vpack.c.b16 %v199, %v195
  %v316 = vpack.c.b16 %v200, %v196
  %v317 = vpack.c.b16 %v201, %v197
  %v318 = vpack.c.b16 %v202, %v198
  %v319 = vpack.c.b16 %v207, %v203
  %v320 = vpack.c.b16 %v208, %v204
  %v321 = vpack.c.b16 %v209, %v205
  %v322 = vpack.c.b16 %v210, %v206
  %v323 = vpack.c.b16 %v215, %v211
  %v324 = vpack.c.b16 %v216, %v212
  %v325 = vpack.c.b16 %v217, %v213
  %v326 = vpack.c.b16 %v218, %v214
  %v327 = vpack.c.b16 %v223, %v219
  %v328 = vpack.c.b16 %v224, %v220
  %v329 = vpack.c.b16 %v225, %v221
  %v330 = vpack.c.b16 %v226, %v222
  %v331 = vpack.c.b16 %v231, %v227
  %v332 = vpack.c.b16 %v232, %v228
  %v333 = vpack.c.b16 %v233, %v229
  %v334 = vpack.c.b16 %v234, %v230
  %v335 = vpack.c.b16 %v239, %v235
  %v336 = vpack.c.b16 %v240, %v236
  %v337 = vpack.c.b16 %v241, %v237
  %v338 = vpack.c.b16 %v242, %v238
  %v339 = vpack.c.b16 %v247, %v243
  %v340 = vpack.c.b16 %v248, %v244
  %v341 = vpack.c.b16 %v249, %v245
  %v342 = vpack.c.b16 %v250, %v246
  %v343 = vpack.c.b16 %v255, %v251
  %v344 = vpack.c.b16 %v256, %v252
  %v345 = vpack.c.b16 %v257, %v253
  %v346 = vpack.c.b16 %v258, %v254
  %v347 = vpack.c.b16 %v263, %v259
  %v348 = vpack.c.b16 %v264, %v260
  %v349 = vpack.c.b16 %v265, %v261
  %v350 = vpack.c.b16 %v266, %v262
  %v351 = vpack.c.b16 %v271, %v267
  %v352 = vpack.c.b16 %v272, %v268
  %v353 = vpack.c.b16 %v273, %v269
  %v354 = vpack.c.b16 %v274, %v270
  %v355 = vpack.c.b16 %v279, %v275
  %v356 = vpack.c.b16 %v280, %v276
  %v357 = vpack.c.b16 %v281, %v277
  %v358 = vpack.c.b16 %v282, %v278
  %v359 = vpack.c.b16 %v287, %v283
  %v360 = vpack.c.b16 %v288, %v284
  %v361 = vpack.c.b16 %v289, %v285
  %v362 = vpack.c.b16 %v290, %v286
  %v363 = vpack.c.b16 %v295, %v291
  %v364 = vpack.c.b16 %v296, %v292
  %v365 = vpack.c.b16 %v297, %v293
  %v366 = vpack.c.b16 %v298, %v294
  %v367 = vpack.c.b16 %v303, %v299
  %v368 = vpack.c.b16 %v304, %v300
  %v369 = vpack.c.b16 %v305, %v301
  %v370 = vpack.c.b16 %v306, %v302
  %435 = vmatprep.subr.bf16.mxu0 %v308
  %436 = vmatpush1.bf16.msra.mxu0 %v307
  %437 = vmatprep.subr.bf16.mxu0 %v312
  %438 = vmatpush1.bf16.msra.mxu0 %v311
  %439 = vmatprep.subr.bf16.mxu0 %v316
  %440 = vmatpush1.bf16.msra.mxu0 %v315
  %441 = vmatprep.subr.bf16.mxu0 %v320
  %442 = vmatpush1.bf16.msra.mxu0 %v319
  %443 = vmatprep.subr.bf16.mxu0 %v324
  %444 = vmatpush1.bf16.msra.mxu0 %v323
  %445 = vmatprep.subr.bf16.mxu0 %v328
  %446 = vmatpush1.bf16.msra.mxu0 %v327
  %447 = vmatprep.subr.bf16.mxu0 %v332
  %448 = vmatpush1.bf16.msra.mxu0 %v331
  %449 = vmatprep.subr.bf16.mxu0 %v336
  %450 = vmatpush1.bf16.msra.mxu0 %v335
  %451 = vmatprep.subr.bf16.mxu0 %v340
  %452 = vmatpush1.bf16.msra.mxu0 %v339
  %453 = vmatprep.subr.bf16.mxu0 %v344
  %454 = vmatpush1.bf16.msra.mxu0 %v343
  %455 = vmatprep.subr.bf16.mxu0 %v348
  %456 = vmatpush1.bf16.msra.mxu0 %v347
  %457 = vmatprep.subr.bf16.mxu0 %v352
  %458 = vmatpush1.bf16.msra.mxu0 %v351
  %459 = vmatprep.subr.bf16.mxu0 %v356
  %460 = vmatpush1.bf16.msra.mxu0 %v355
  %461 = vmatprep.subr.bf16.mxu0 %v360
  %462 = vmatpush1.bf16.msra.mxu0 %v359
  %463 = vmatprep.subr.bf16.mxu0 %v364
  %464 = vmatpush1.bf16.msra.mxu0 %v363
  %465 = vmatprep.subr.bf16.mxu0 %v368
  %466 = vmatpush1.bf16.msra.mxu0 %v367
  %467 = vmatprep.mubr.bf16.mxu0 %v112
  %468 = vmatmul.mubr.bf16.gmra.mrb[0].mxu0 %v111
  %v469 = vpop.f32.mrb[0].mxu0
  %v470 = vadd.f32 %v91, %v469
  %v471 = vpop.f32.mrb[0].mxu0
  %v472 = vadd.f32 %v95, %v471
  %v473 = vpop.f32.mrb[0].mxu0
  %v474 = vpop.f32.mrb[0].mxu0
  %475 = vdwg.mxu0
  %476 = vmatprep.subr.bf16.mxu0 %v310
  %477 = vmatpush1.bf16.msra.mxu0 %v309
  %478 = vmatprep.subr.bf16.mxu0 %v314
  %479 = vmatpush1.bf16.msra.mxu0 %v313
  %480 = vmatprep.subr.bf16.mxu0 %v318
  %481 = vmatpush1.bf16.msra.mxu0 %v317
  %482 = vmatprep.subr.bf16.mxu0 %v322
  %483 = vmatpush1.bf16.msra.mxu0 %v321
  %484 = vmatprep.subr.bf16.mxu0 %v326
  %485 = vmatpush1.bf16.msra.mxu0 %v325
  %486 = vmatprep.subr.bf16.mxu0 %v330
  %487 = vmatpush1.bf16.msra.mxu0 %v329
  %488 = vmatprep.subr.bf16.mxu0 %v334
  %489 = vmatpush1.bf16.msra.mxu0 %v333
  %490 = vmatprep.subr.bf16.mxu0 %v338
  %491 = vmatpush1.bf16.msra.mxu0 %v337
  %492 = vmatprep.subr.bf16.mxu0 %v342
  %493 = vmatpush1.bf16.msra.mxu0 %v341
  %494 = vmatprep.subr.bf16.mxu0 %v346
  %495 = vmatpush1.bf16.msra.mxu0 %v345
  %496 = vmatprep.subr.bf16.mxu0 %v350
  %497 = vmatpush1.bf16.msra.mxu0 %v349
  %498 = vmatprep.subr.bf16.mxu0 %v354
  %499 = vmatpush1.bf16.msra.mxu0 %v353
  %500 = vmatprep.subr.bf16.mxu0 %v358
  %501 = vmatpush1.bf16.msra.mxu0 %v357
  %502 = vmatprep.subr.bf16.mxu0 %v362
  %503 = vmatpush1.bf16.msra.mxu0 %v361
  %504 = vmatprep.subr.bf16.mxu0 %v366
  %505 = vmatpush1.bf16.msra.mxu0 %v365
  %506 = vmatprep.subr.bf16.mxu0 %v370
  %507 = vmatpush1.bf16.msra.mxu0 %v369
  %508 = vmatprep.mubr.bf16.mxu0 %v112
  %509 = vmatmul.mubr.bf16.gmra.mrb[0].mxu0 %v111
  %v510 = vpop.f32.mrb[0].mxu0
  %v511 = vadd.f32 %v99, %v510
  %v512 = vpop.f32.mrb[0].mxu0
  %v513 = vadd.f32 %v103, %v512
  %v514 = vpop.f32.mrb[0].mxu0
  %v515 = vpop.f32.mrb[0].mxu0
  %516 = vdwg.mxu0
  %v517 = vmax.f32 %v470, 0.0
  %v518 = vmax.f32 %v472, 0.0
  %v519 = vmax.f32 %v511, 0.0
  %v520 = vmax.f32 %v513, 0.0
  %v521 = vpack.c.bf16 %v517, %v517
  %v522 = vpack.c.bf16 %v518, %v518
  %v523 = vpack.c.bf16 %v519, %v519
  %v524 = vpack.c.bf16 %v520, %v520
  %v525 = vld [vmem:[%s3] sm:$0xf]
  %v526 = vld [vmem:[%s3 + $0x4] sm:$0xf]
  %v527 = vld [vmem:[%s3 + $0x8] sm:$0xf]
  %v528 = vld [vmem:[%s3 + $0xc] sm:$0xf]
  %v529 = vld [vmem:[%s3 + $0x10] sm:$0xf]
  %v530 = vld [vmem:[%s3 + $0x14] sm:$0xf]
  %v531 = vld [vmem:[%s3 + $0x18] sm:$0xf]
  %v532 = vld [vmem:[%s3 + $0x1c] sm:$0xf]
  %v533 = vld [vmem:[%s3 + $0x20] sm:$0xf]
  %v534 = vld [vmem:[%s3 + $0x24] sm:$0xf]
  %v535 = vld [vmem:[%s3 + $0x28] sm:$0xf]
  %v536 = vld [vmem:[%s3 + $0x2c] sm:$0xf]
  %v537 = vld [vmem:[%s3 + $0x30] sm:$0xf]
  %v538 = vld [vmem:[%s3 + $0x34] sm:$0xf]
  %v539 = vld [vmem:[%s3 + $0x38] sm:$0xf]
  %v540 = vld [vmem:[%s3 + $0x3c] sm:$0xf]
  %v541 = vld [vmem:[%s3 + $0x40] sm:$0xf]
  %v542 = vld [vmem:[%s3 + $0x44] sm:$0xf]
  %v543 = vld [vmem:[%s3 + $0x48] sm:$0xf]
  %v544 = vld [vmem:[%s3 + $0x4c] sm:$0xf]
  %v545 = vld [vmem:[%s3 + $0x50] sm:$0xf]
  %v546 = vld [vmem:[%s3 + $0x54] sm:$0xf]
  %v547 = vld [vmem:[%s3 + $0x58] sm:$0xf]
  %v548 = vld [vmem:[%s3 + $0x5c] sm:$0xf]
  %v549 = vld [vmem:[%s3 + $0x60] sm:$0xf]
  %v550 = vld [vmem:[%s3 + $0x64] sm:$0xf]
  %v551 = vld [vmem:[%s3 + $0x68] sm:$0xf]
  %v552 = vld [vmem:[%s3 + $0x6c] sm:$0xf]
  %v553 = vld [vmem:[%s3 + $0x70] sm:$0xf]
  %v554 = vld [vmem:[%s3 + $0x74] sm:$0xf]
  %v555 = vld [vmem:[%s3 + $0x78] sm:$0xf]
  %v556 = vld [vmem:[%s3 + $0x7c] sm:$0xf]
  %v557 = vld [vmem:[%s3 + $0x80] sm:$0xf]
  %v558 = vld [vmem:[%s3 + $0x84] sm:$0xf]
  %v559 = vld [vmem:[%s3 + $0x88] sm:$0xf]
  %v560 = vld [vmem:[%s3 + $0x8c] sm:$0xf]
  %v561 = vld [vmem:[%s3 + $0x90] sm:$0xf]
  %v562 = vld [vmem:[%s3 + $0x94] sm:$0xf]
  %v563 = vld [vmem:[%s3 + $0x98] sm:$0xf]
  %v564 = vld [vmem:[%s3 + $0x9c] sm:$0xf]
  %v565 = vld [vmem:[%s3 + $0xa0] sm:$0xf]
  %v566 = vld [vmem:[%s3 + $0xa4] sm:$0xf]
  %v567 = vld [vmem:[%s3 + $0xa8] sm:$0xf]
  %v568 = vld [vmem:[%s3 + $0xac] sm:$0xf]
  %v569 = vld [vmem:[%s3 + $0xb0] sm:$0xf]
  %v570 = vld [vmem:[%s3 + $0xb4] sm:$0xf]
  %v571 = vld [vmem:[%s3 + $0xb8] sm:$0xf]
  %v572 = vld [vmem:[%s3 + $0xbc] sm:$0xf]
  %v573 = vld [vmem:[%s3 + $0xc0] sm:$0xf]
  %v574 = vld [vmem:[%s3 + $0xc4] sm:$0xf]
  %v575 = vld [vmem:[%s3 + $0xc8] sm:$0xf]
  %v576 = vld [vmem:[%s3 + $0xcc] sm:$0xf]
  %v577 = vld [vmem:[%s3 + $0xd0] sm:$0xf]
  %v578 = vld [vmem:[%s3 + $0xd4] sm:$0xf]
  %v579 = vld [vmem:[%s3 + $0xd8] sm:$0xf]
  %v580 = vld [vmem:[%s3 + $0xdc] sm:$0xf]
  %v581 = vld [vmem:[%s3 + $0xe0] sm:$0xf]
  %v582 = vld [vmem:[%s3 + $0xe4] sm:$0xf]
  %v583 = vld [vmem:[%s3 + $0xe8] sm:$0xf]
  %v584 = vld [vmem:[%s3 + $0xec] sm:$0xf]
  %v585 = vld [vmem:[%s3 + $0xf0] sm:$0xf]
  %v586 = vld [vmem:[%s3 + $0xf4] sm:$0xf]
  %v587 = vld [vmem:[%s3 + $0xf8] sm:$0xf]
  %v588 = vld [vmem:[%s3 + $0xfc] sm:$0xf]
  %v589 = vld [vmem:[%s4] sm:$0x1]
  %v591 = vlaneseq
  %v592 = vshrl.u32 %v591, 7
  %v593 = vsub.s32 0, %v592
  %v594 = vrot.slane %v589, %v593
  %v660 = vunpack.c.l.b16 %v525
  %v661 = vunpack.c.l.b16 %v526
  %v662 = vunpack.c.l.b16 %v527
  %v663 = vunpack.c.l.b16 %v528
  %v664 = vunpack.c.l.b16 %v529
  %v665 = vunpack.c.l.b16 %v530
  %v666 = vunpack.c.l.b16 %v531
  %v667 = vunpack.c.l.b16 %v532
  %v668 = vunpack.c.l.b16 %v533
  %v669 = vunpack.c.l.b16 %v534
  %v670 = vunpack.c.l.b16 %v535
  %v671 = vunpack.c.l.b16 %v536
  %v672 = vunpack.c.l.b16 %v537
  %v673 = vunpack.c.l.b16 %v538
  %v674 = vunpack.c.l.b16 %v539
  %v675 = vunpack.c.l.b16 %v540
  %v676 = vunpack.c.l.b16 %v541
  %v677 = vunpack.c.l.b16 %v542
  %v678 = vunpack.c.l.b16 %v543
  %v679 = vunpack.c.l.b16 %v544
  %v680 = vunpack.c.l.b16 %v545
  %v681 = vunpack.c.l.b16 %v546
  %v682 = vunpack.c.l.b16 %v547
  %v683 = vunpack.c.l.b16 %v548
  %v684 = vunpack.c.l.b16 %v549
  %v685 = vunpack.c.l.b16 %v550
  %v686 = vunpack.c.l.b16 %v551
  %v687 = vunpack.c.l.b16 %v552
  %v688 = vunpack.c.l.b16 %v553
  %v689 = vunpack.c.l.b16 %v554
  %v690 = vunpack.c.l.b16 %v555
  %v691 = vunpack.c.l.b16 %v556
  %v692 = vunpack.c.l.b16 %v557
  %v693 = vunpack.c.l.b16 %v558
  %v694 = vunpack.c.l.b16 %v559
  %v695 = vunpack.c.l.b16 %v560
  %v696 = vunpack.c.l.b16 %v561
  %v697 = vunpack.c.l.b16 %v562
  %v698 = vunpack.c.l.b16 %v563
  %v699 = vunpack.c.l.b16 %v564
  %v700 = vunpack.c.l.b16 %v565
  %v701 = vunpack.c.l.b16 %v566
  %v702 = vunpack.c.l.b16 %v567
  %v703 = vunpack.c.l.b16 %v568
  %v704 = vunpack.c.l.b16 %v569
  %v705 = vunpack.c.l.b16 %v570
  %v706 = vunpack.c.l.b16 %v571
  %v707 = vunpack.c.l.b16 %v572
  %v708 = vunpack.c.l.b16 %v573
  %v709 = vunpack.c.l.b16 %v574
  %v710 = vunpack.c.l.b16 %v575
  %v711 = vunpack.c.l.b16 %v576
  %v712 = vunpack.c.l.b16 %v577
  %v713 = vunpack.c.l.b16 %v578
  %v714 = vunpack.c.l.b16 %v579
  %v715 = vunpack.c.l.b16 %v580
  %v716 = vunpack.c.l.b16 %v581
  %v717 = vunpack.c.l.b16 %v582
  %v718 = vunpack.c.l.b16 %v583
  %v719 = vunpack.c.l.b16 %v584
  %v720 = vunpack.c.l.b16 %v585
  %v721 = vunpack.c.l.b16 %v586
  %v722 = vunpack.c.l.b16 %v587
  %v723 = vunpack.c.l.b16 %v588
  %v724 = vpack.c.b16 %v661, %v660
  %v725 = vpack.c.b16 %v663, %v662
  %v726 = vpack.c.b16 %v665, %v664
  %v727 = vpack.c.b16 %v667, %v666
  %v728 = vpack.c.b16 %v669, %v668
  %v729 = vpack.c.b16 %v671, %v670
  %v730 = vpack.c.b16 %v673, %v672
  %v731 = vpack.c.b16 %v675, %v674
  %v732 = vpack.c.b16 %v677, %v676
  %v733 = vpack.c.b16 %v679, %v678
  %v734 = vpack.c.b16 %v681, %v680
  %v735 = vpack.c.b16 %v683, %v682
  %v736 = vpack.c.b16 %v685, %v684
  %v737 = vpack.c.b16 %v687, %v686
  %v738 = vpack.c.b16 %v689, %v688
  %v739 = vpack.c.b16 %v691, %v690
  %v740 = vpack.c.b16 %v693, %v692
  %v741 = vpack.c.b16 %v695, %v694
  %v742 = vpack.c.b16 %v697, %v696
  %v743 = vpack.c.b16 %v699, %v698
  %v744 = vpack.c.b16 %v701, %v700
  %v745 = vpack.c.b16 %v703, %v702
  %v746 = vpack.c.b16 %v705, %v704
  %v747 = vpack.c.b16 %v707, %v706
  %v748 = vpack.c.b16 %v709, %v708
  %v749 = vpack.c.b16 %v711, %v710
  %v750 = vpack.c.b16 %v713, %v712
  %v751 = vpack.c.b16 %v715, %v714
  %v752 = vpack.c.b16 %v717, %v716
  %v753 = vpack.c.b16 %v719, %v718
  %v754 = vpack.c.b16 %v721, %v720
  %v755 = vpack.c.b16 %v723, %v722
  %788 = vmatprep.subr.bf16.mxu0 0
  %789 = vmatpush1.bf16.msra.mxu0 %v724
  %790 = vmatprep.subr.bf16.mxu0 0
  %791 = vmatpush1.bf16.msra.mxu0 %v725
  %792 = vmatprep.subr.bf16.mxu0 0
  %793 = vmatpush1.bf16.msra.mxu0 %v726
  %794 = vmatprep.subr.bf16.mxu0 0
  %795 = vmatpush1.bf16.msra.mxu0 %v727
  %796 = vmatprep.subr.bf16.mxu0 0
  %797 = vmatpush1.bf16.msra.mxu0 %v728
  %798 = vmatprep.subr.bf16.mxu0 0
  %799 = vmatpush1.bf16.msra.mxu0 %v729
  %800 = vmatprep.subr.bf16.mxu0 0
  %801 = vmatpush1.bf16.msra.mxu0 %v730
  %802 = vmatprep.subr.bf16.mxu0 0
  %803 = vmatpush1.bf16.msra.mxu0 %v731
  %804 = vmatprep.subr.bf16.mxu0 0
  %805 = vmatpush1.bf16.msra.mxu0 %v732
  %806 = vmatprep.subr.bf16.mxu0 0
  %807 = vmatpush1.bf16.msra.mxu0 %v733
  %808 = vmatprep.subr.bf16.mxu0 0
  %809 = vmatpush1.bf16.msra.mxu0 %v734
  %810 = vmatprep.subr.bf16.mxu0 0
  %811 = vmatpush1.bf16.msra.mxu0 %v735
  %812 = vmatprep.subr.bf16.mxu0 0
  %813 = vmatpush1.bf16.msra.mxu0 %v736
  %814 = vmatprep.subr.bf16.mxu0 0
  %815 = vmatpush1.bf16.msra.mxu0 %v737
  %816 = vmatprep.subr.bf16.mxu0 0
  %817 = vmatpush1.bf16.msra.mxu0 %v738
  %818 = vmatprep.subr.bf16.mxu0 0
  %819 = vmatpush1.bf16.msra.mxu0 %v739
  %820 = vmatprep.mubr.bf16.mxu0 %v522
  %821 = vmatmul.mubr.bf16.gmra.mrb[0].mxu0 %v521
  %v822 = vpop.f32.mrb[0].mxu0
  %v823 = vadd.f32 %v594, %v822
  %v824 = vpop.f32.mrb[0].mxu0
  %v825 = vpop.f32.mrb[0].mxu0
  %v826 = vpop.f32.mrb[0].mxu0
  %827 = vdwg.mxu0
  %828 = vmatprep.subr.bf16.mxu0 0
  %829 = vmatpush1.bf16.msra.mxu0 %v740
  %830 = vmatprep.subr.bf16.mxu0 0
  %831 = vmatpush1.bf16.msra.mxu0 %v741
  %832 = vmatprep.subr.bf16.mxu0 0
  %833 = vmatpush1.bf16.msra.mxu0 %v742
  %834 = vmatprep.subr.bf16.mxu0 0
  %835 = vmatpush1.bf16.msra.mxu0 %v743
  %836 = vmatprep.subr.bf16.mxu0 0
  %837 = vmatpush1.bf16.msra.mxu0 %v744
  %838 = vmatprep.subr.bf16.mxu0 0
  %839 = vmatpush1.bf16.msra.mxu0 %v745
  %840 = vmatprep.subr.bf16.mxu0 0
  %841 = vmatpush1.bf16.msra.mxu0 %v746
  %842 = vmatprep.subr.bf16.mxu0 0
  %843 = vmatpush1.bf16.msra.mxu0 %v747
  %844 = vmatprep.subr.bf16.mxu0 0
  %845 = vmatpush1.bf16.msra.mxu0 %v748
  %846 = vmatprep.subr.bf16.mxu0 0
  %847 = vmatpush1.bf16.msra.mxu0 %v749
  %848 = vmatprep.subr.bf16.mxu0 0
  %849 = vmatpush1.bf16.msra.mxu0 %v750
  %850 = vmatprep.subr.bf16.mxu0 0
  %851 = vmatpush1.bf16.msra.mxu0 %v751
  %852 = vmatprep.subr.bf16.mxu0 0
  %853 = vmatpush1.bf16.msra.mxu0 %v752
  %854 = vmatprep.subr.bf16.mxu0 0
  %855 = vmatpush1.bf16.msra.mxu0 %v753
  %856 = vmatprep.subr.bf16.mxu0 0
  %857 = vmatpush1.bf16.msra.mxu0 %v754
  %858 = vmatprep.subr.bf16.mxu0 0
  %859 = vmatpush1.bf16.msra.mxu0 %v755
  %860 = vmatprep.mubr.bf16.mxu0 %v524
  %861 = vmatmul.mubr.bf16.gmra.mrb[0].mxu0 %v523
  %v862 = vpop.f32.mrb[0].mxu0
  %v863 = vadd.f32 %v823, %v862
  %v864 = vpop.f32.mrb[0].mxu0
  %v865 = vpop.f32.mrb[0].mxu0
  %v866 = vpop.f32.mrb[0].mxu0
  %867 = vdwg.mxu0
  %868 = vst [vmem:[%s5] sm:$0xff] %v863
  // Predicated region
  $region22: #{dqn_forward.7} parent=0 // pred_check
    _
  $region23: #{dqn_forward.7} parent=0 // pred_check_branch
    %870 = sbr.rel (0) target = $region25
  $region24: #{dqn_forward.7} parent=0 // pred_region
    _
  $region25: #{dqn_forward.7} parent=0 // pred_fallthru
    _
  // Predicated region
  $region26: #{dqn_forward.7} parent=0 // pred_check
    _
  $region27: #{dqn_forward.7} parent=0 // pred_check_branch
    %872 = sbr.rel (0) target = $region29
  $region28: #{dqn_forward.7} parent=0 // pred_region
    _
  $region29: #{dqn_forward.7} parent=0 // pred_fallthru
    _

</llo_original>
